<compile_context>
chip_gen: v6e
topology: v6e:2x2x1
jax: 0.10.0
libtpu: 0.0.40
codegen_flags: <defaults>
</compile_context>

<pallas_src>
import functools

import jax
import jax.numpy as jnp
from jax import lax
from jax.experimental import pallas as pl
from jax.experimental.pallas import tpu as pltpu


_CHUNK = 1024   # static M sub-chunk inside one kernel invocation


# ------------------------------ helpers ------------------------------------ #

def _rup(x, m):
    return (x + m - 1) // m * m


@functools.lru_cache(maxsize=None)
def _vmem_limit_bytes():
    """Generation-aware scoped-VMEM limit (v5e/v6e: 128 MiB phys, v7x: 64 MiB)."""
    cap = 128 * 1024 * 1024
    try:
        info = pltpu.get_tpu_info()
        cap = int(getattr(info, "vmem_capacity_bytes", cap) or cap)
    except Exception:
        pass
    return max(min(cap * 3 // 4, 100 * 1024 * 1024), 32 * 1024 * 1024)


def _vmem_estimate_bytes(rows_in, ce, ntaps, cout, length, n_out, out_bytes,
                         chunk, n2=None):
    """Per-grid-step footprint; every pipelined block counted double-buffered."""
    cep, coutp, n_outp = _rup(ce, 128), _rup(cout, 128), _rup(n_out, 128)
    est = 2 * _rup(rows_in, 8) * cep * 2                       # X block (bf16)
    est += 2 * (ntaps * _rup(ce, 8) * coutp * 2 + coutp * 4)   # W + bias
    est += 2 * _rup(length, 8) * n_outp * out_bytes            # out block
    est += _rup(min(length, chunk), 8) * coutp * 4             # f32 accumulator
    if n2 is not None:
        n2p = _rup(n2, 128)
        est += 2 * (_rup(cout, 8) * n2p * 2 + n2p * 4)         # W2 + bias2
    return est


# ----------------------- wrapper-side layout plumbing ----------------------- #

def _prep_input(x, kh, kw, stride, pad):
    """Pad + (for stride 2) space-to-depth + flatten spatial.

    Returns x_flat:(B, rows, Ce), (khe, kwe, Ce), Win, L(=Ho*Win), Ho, Wo.
    After this transform the conv is stride-1 with khe x kwe taps, and tap
    (i, j) for flat output row m reads flat input row  i*Win + j + m.
    """
    B, H, W, C = x.shape
    xp = jnp.pad(x, ((0, 0), (pad, pad), (pad, pad), (0, 0)))
    Hp, Wp = H + 2 * pad, W + 2 * pad
    if stride == 1:
        khe, kwe, ce = kh, kw, C
        hin, win = Hp, Wp
        xs = xp
    elif stride == 2:
        s = stride
        if kh % s or kw % s or Hp % s or Wp % s:
            raise NotImplementedError("stride-2 path needs even padded dims")
        khe, kwe, ce = kh // s, kw // s, C * s * s
        hin, win = Hp // s, Wp // s
        xs = xp.reshape(B, hin, s, win, s, C)
        xs = jnp.transpose(xs, (0, 1, 3, 2, 4, 5)).reshape(B, hin, win, ce)
    else:
        raise NotImplementedError("only stride 1 or 2")
    ho, wo = hin - khe + 1, win - kwe + 1
    length = ho * win                                   # includes wrap-around cols
    x_flat = xs.reshape(B, hin * win, ce)
    if kwe > 1:                                         # rows needed by last taps
        x_flat = jnp.pad(x_flat, ((0, 0), (0, kwe - 1), (0, 0)))
    return x_flat, (khe, kwe, ce), win, length, ho, wo


def _prep_weight(weight, stride):
    """(Cout, Cin, kh, kw) -> (taps, Ce, Cout) bf16, matching _prep_input order."""
    cout, cin, kh, kw = weight.shape
    if stride == 1:
        wt = jnp.transpose(weight, (2, 3, 1, 0)).reshape(kh * kw, cin, cout)
    else:
        s = stride
        khe, kwe = kh // s, kw // s
        wt = weight.reshape(cout, cin, khe, s, kwe, s)       # (o, c, qi, hp, qj, wp)
        wt = jnp.transpose(wt, (2, 4, 3, 5, 1, 0))           # (qi, qj, hp, wp, c, o)
        wt = wt.reshape(khe * kwe, s * s * cin, cout)
    return wt.astype(jnp.bfloat16)


# ----------------------------- Pallas kernels ------------------------------- #

def _tap_accumulate(x_ref, w_ref, taps, win, m0, rows):
    """sum_t  X[m0 + i*win + j : ... + rows] @ W[t]  -> (rows, Cout) f32."""
    n = w_ref.shape[-1]
    acc = jnp.zeros((rows, n), jnp.float32)
    for t, (i, j) in enumerate(taps):
        start = m0 + i * win + j                              # static offset
        a = x_ref[0, pl.ds(start, rows), :]                   # contiguous window
        acc = acc + jnp.dot(a, w_ref[t], preferred_element_type=jnp.float32)
    return acc


def _conv_tap_kernel(x_ref, w_ref, b_ref, o_ref, *, taps, win, length, relu):
    for m0 in range(0, length, _CHUNK):
        rows = min(_CHUNK, length - m0)
        acc = _tap_accumulate(x_ref, w_ref, taps, win, m0, rows)
        acc = acc + b_ref[...]
        if relu:
            acc = jnp.maximum(acc, 0.0)
        o_ref[0, pl.ds(m0, rows), :] = acc.astype(o_ref.dtype)


def _conv_tap_fused_kernel(x_ref, w_ref, b_ref, w2_ref, b2_ref, o_ref, *,
                           taps, win, length, relu_inner, relu_out):
    # conv3 chunk -> bias/ReLU -> 1x1 conv4 matmul -> single store per chunk.
    for m0 in range(0, length, _CHUNK):
        rows = min(_CHUNK, length - m0)
        h = _tap_accumulate(x_ref, w_ref, taps, win, m0, rows)
        h = h + b_ref[...]
        if relu_inner:
            h = jnp.maximum(h, 0.0)
        out = jnp.dot(h.astype(w2_ref.dtype), w2_ref[...],
                      preferred_element_type=jnp.float32) + b2_ref[...]
        if relu_out:
            out = jnp.maximum(out, 0.0)
        o_ref[0, pl.ds(m0, rows), :] = out.astype(o_ref.dtype)


# ------------------------------ conv wrapper -------------------------------- #

def conv2d_pallas(x_nhwc, weight, bias, *, stride, pad, relu, out_dtype,
                  fuse=None):
    """PyTorch-semantics Conv2d on NHWC activations; optional fused 1x1 conv."""
    x_nhwc = x_nhwc.astype(jnp.bfloat16)
    kh, kw = weight.shape[2], weight.shape[3]
    x_flat, (khe, kwe, ce), win, length, ho, wo = _prep_input(
        x_nhwc, kh, kw, stride, pad)
    wt = _prep_weight(weight, stride)                         # (T, Ce, Cout)
    taps = [(i, j) for i in range(khe) for j in range(kwe)]
    ntaps, ce_w, cout = wt.shape
    assert ce_w == ce and ntaps == len(taps)
    bvec = bias.astype(jnp.float32).reshape(1, cout)

    B, rows_in, _ = x_flat.shape
    args = [x_flat, wt, bvec]
    in_specs = [
        pl.BlockSpec((1, rows_in, ce), lambda b: (b, 0, 0)),    # X: per-batch
        pl.BlockSpec((ntaps, ce, cout), lambda b: (0, 0, 0)),   # W: resident
        pl.BlockSpec((1, cout), lambda b: (0, 0)),              # bias: resident
    ]

    if fuse is not None:
        w2, b2 = fuse                                          # (C2, Cout, 1, 1)
        c2out = w2.shape[0]
        w2m = w2.reshape(c2out, cout).T.astype(jnp.bfloat16)   # (Cout, C2)
        b2v = b2.astype(jnp.float32).reshape(1, c2out)
        args += [w2m, b2v]
        in_specs += [pl.BlockSpec((cout, c2out), lambda b: (0, 0)),
                     pl.BlockSpec((1, c2out), lambda b: (0, 0))]
        n_out = c2out
        kernel = functools.partial(_conv_tap_fused_kernel, taps=taps, win=win,
                                   length=length, relu_inner=relu,
                                   relu_out=False)
        flops = 2 * B * length * ce * cout * ntaps + 2 * B * length * cout * c2out
    else:
        n_out = cout
        kernel = functools.partial(_conv_tap_kernel, taps=taps, win=win,
                                   length=length, relu=relu)
        flops = 2 * B * length * ce * cout * ntaps

    out_bytes = jnp.dtype(out_dtype).itemsize
    limit = _vmem_limit_bytes()
    est = _vmem_estimate_bytes(rows_in, ce, ntaps, cout, length, n_out,
                               out_bytes, _CHUNK,
                               n2=(n_out if fuse is not None else None))
    if est > limit:
        # TODO(synk): spatial tiling of a single batch element (manual DMA over
        #             overlapping row windows) for very large images.
        raise RuntimeError(f"per-step VMEM estimate {est}B exceeds limit {limit}B")

    bytes_accessed = (sum(int(a.size) * a.dtype.itemsize for a in args)
                      + B * length * n_out * out_bytes)

    out = pl.pallas_call(
        kernel,
        out_shape=jax.ShapeDtypeStruct((B, length, n_out), out_dtype),
        grid=(B,),
        in_specs=in_specs,
        out_specs=pl.BlockSpec((1, length, n_out), lambda b: (b, 0, 0)),
        compiler_params=pltpu.CompilerParams(
            dimension_semantics=("parallel",),   # batch elems -> v7x megacore
            vmem_limit_bytes=limit),
        cost_estimate=pl.CostEstimate(flops=int(flops), transcendentals=0,
                                      bytes_accessed=int(bytes_accessed)),
    )(*args)

    # Drop the (kwe - 1) wrap-around columns per output row, back to NHWC.
    out = out.reshape(B, ho, win, n_out)[:, :, :wo, :]
    return out


# ------------------------------- EarlyCNN ---------------------------------- #

def init_early_cnn_params(key, in_channels, encoder_dim, mode='image'):
    d = encoder_dim

    def mk(k, cout, cin, kh, kw):
        kw_, kb_ = jax.random.split(k)
        w = jax.random.normal(kw_, (cout, cin, kh, kw), jnp.float32) * 0.02
        b = jax.random.normal(kb_, (cout,), jnp.float32) * 0.01
        return w, b

    k1, k2, k3, k4 = jax.random.split(key, 4)
    params = {}
    params['conv1'] = mk(k1, d // 8, in_channels, 4, 4)
    params['conv2'] = mk(k2, d // 4, d // 8, 4, 4)
    if mode == 'image':
        params['conv3'] = mk(k3, d // 2, d // 4, 4, 4)
    else:
        params['conv3'] = mk(k3, d // 2, d // 4, 3, 3)
    params['conv4'] = mk(k4, d, d // 2, 1, 1)
    return params


def early_cnn_forward(params, x_nchw, mode='image'):
    w1, b1 = params['conv1']
    w2, b2 = params['conv2']
    w3, b3 = params['conv3']
    w4, b4 = params['conv4']

    # Single layout change at the boundary: NCHW -> NHWC, then stay NHWC/bf16.
    x = jnp.transpose(x_nchw, (0, 2, 3, 1)).astype(jnp.bfloat16)
    x = conv2d_pallas(x, w1, b1, stride=2, pad=1, relu=True,
                      out_dtype=jnp.bfloat16)
    x = conv2d_pallas(x, w2, b2, stride=2, pad=1, relu=True,
                      out_dtype=jnp.bfloat16)
    s3 = 2 if mode == 'image' else 1
    # conv3 (+ReLU) with conv4 (1x1, no ReLU) fused; bf16 writeback.
    x = conv2d_pallas(x, w3, b3, stride=s3, pad=1, relu=True,
                      out_dtype=jnp.bfloat16, fuse=(w4, b4))
    # (B, Ho, Wo, enc) -> (B, Ho*Wo, enc) == conv4(x).flatten(2).transpose(1, 2)
    B, Ho, Wo, C = x.shape
    return x.reshape(B, Ho * Wo, C)


# ---------------------------- reference (XLA) ------------------------------- #

def _conv_ref(x, w, b, stride, pad):
    out = lax.conv_general_dilated(
        x, w, window_strides=(stride, stride),
        padding=((pad, pad), (pad, pad)),
        dimension_numbers=('NCHW', 'OIHW', 'NCHW'))
    return out + b.reshape(1, -1, 1, 1)


def early_cnn_forward_ref(params, x, mode='image'):
    w1, b1 = params['conv1']; w2, b2 = params['conv2']
    w3, b3 = params['conv3']; w4, b4 = params['conv4']
    x = jax.nn.relu(_conv_ref(x, w1, b1, 2, 1))
    x = jax.nn.relu(_conv_ref(x, w2, b2, 2, 1))
    if mode == 'image':
        x = jax.nn.relu(_conv_ref(x, w3, b3, 2, 1))
    else:
        x = jax.nn.relu(_conv_ref(x, w3, b3, 1, 1))
    x = _conv_ref(x, w4, b4, 1, 0)
    B, C, H, W = x.shape
    return x.reshape(B, C, H * W).transpose(0, 2, 1)


# ---------------------------------- main ------------------------------------ #

if __name__ == "__main__":
    key = jax.random.PRNGKey(0)
    k_x, k_p, k_p2 = jax.random.split(key, 3)

    B, Cin, Hs, Ws = 2, 4, 16, 16
    encoder_dim = 32

    x = jax.random.normal(k_x, (B, Cin, Hs, Ws), jnp.float32)

    # --- image mode: 3x (4x4, stride 2) convs, 1x1 conv fused into the last ---
    params = init_early_cnn_params(k_p, Cin, encoder_dim, mode='image')
    fwd = jax.jit(functools.partial(early_cnn_forward, mode='image'))
    out = jax.block_until_ready(fwd(params, x))
    assert out.shape == (B, (Hs // 8) * (Ws // 8), encoder_dim), out.shape
    ref = jax.block_until_ready(early_cnn_forward_ref(params, x, mode='image'))
    assert jnp.allclose(out.astype(jnp.float32), ref, rtol=2e-2, atol=2e-2), \
        "image-mode mismatch vs XLA reference"

    # --- tactile mode: conv3 is 3x3 / stride 1 ---
    params_t = init_early_cnn_params(k_p2, Cin, encoder_dim, mode='tactile')
    fwd_t = jax.jit(functools.partial(early_cnn_forward, mode='tactile'))
    out_t = jax.block_until_ready(fwd_t(params_t, x))
    assert out_t.shape == (B, (Hs // 4) * (Ws // 4), encoder_dim), out_t.shape
    ref_t = jax.block_until_ready(
        early_cnn_forward_ref(params_t, x, mode='tactile'))
    assert jnp.allclose(out_t.astype(jnp.float32), ref_t, rtol=2e-2, atol=2e-2), \
        "tactile-mode mismatch vs XLA reference"

    print("KERNEL_OK")
</pallas_src>

<mosaic_0001>
module attributes {stable_mosaic.version = 11 : i64} {
  func.func @_conv_tap_kernel(%arg0: i32, %arg1: memref<1x82x16xbf16, #tpu.memory_space<vmem>>, %arg2: memref<4x16x4xbf16, #tpu.memory_space<vmem>>, %arg3: memref<1x4xf32, #tpu.memory_space<vmem>>, %arg4: memref<1x72x4xbf16, #tpu.memory_space<vmem>>) attributes {dimension_semantics = [#tpu.dimension_semantics<parallel>], iteration_bounds = array<i64: 2>, scalar_prefetch = 0 : i64, scratch_operands = 0 : i64, tpu.core_type = #tpu.core_type<tc>, window_params = [{transform_indices = @transform_0, window_bounds = array<i64: 1, 82, 16>}, {pipeline_mode = #tpu.pipeline_mode<synchronous>, transform_indices = @transform_1, window_bounds = array<i64: 4, 16, 4>}, {pipeline_mode = #tpu.pipeline_mode<synchronous>, transform_indices = @transform_2, window_bounds = array<i64: 1, 4>}, {transform_indices = @transform_3, window_bounds = array<i64: 1, 72, 4>}]} {
    %cst = arith.constant 0.000000e+00 : f32
    %0 = vector.broadcast %cst : f32 to vector<72x4xf32>
    %c0 = arith.constant 0 : index
    %c0_0 = arith.constant 0 : index
    %c0_1 = arith.constant 0 : index
    %1 = vector.load %arg1[%c0, %c0_0, %c0_1] : memref<1x82x16xbf16, #tpu.memory_space<vmem>>, vector<1x72x16xbf16>
    %2 = vector.shape_cast %1 : vector<1x72x16xbf16> to vector<72x16xbf16>
    %c0_2 = arith.constant 0 : index
    %c0_3 = arith.constant 0 : index
    %c0_4 = arith.constant 0 : index
    %3 = vector.load %arg2[%c0_2, %c0_3, %c0_4] : memref<4x16x4xbf16, #tpu.memory_space<vmem>>, vector<1x16x4xbf16>
    %4 = vector.shape_cast %3 : vector<1x16x4xbf16> to vector<16x4xbf16>
    %cst_5 = arith.constant dense<0.000000e+00> : vector<72x4xf32>
    %5 = tpu.matmul %2, %4, %cst_5 {dimension_numbers = #tpu.dot_dimension_numbers<[1], [0], [0], [1], [0, 0, 1, 1], [], []>} : vector<72x16xbf16>, vector<16x4xbf16>, vector<72x4xf32> -> vector<72x4xf32>
    %6 = arith.addf %0, %5 : vector<72x4xf32>
    %c0_6 = arith.constant 0 : index
    %c1 = arith.constant 1 : index
    %c0_7 = arith.constant 0 : index
    %7 = vector.load %arg1[%c0_6, %c1, %c0_7] : memref<1x82x16xbf16, #tpu.memory_space<vmem>>, vector<1x72x16xbf16>
    %8 = vector.shape_cast %7 : vector<1x72x16xbf16> to vector<72x16xbf16>
    %c1_8 = arith.constant 1 : index
    %c0_9 = arith.constant 0 : index
    %c0_10 = arith.constant 0 : index
    %9 = vector.load %arg2[%c1_8, %c0_9, %c0_10] : memref<4x16x4xbf16, #tpu.memory_space<vmem>>, vector<1x16x4xbf16>
    %10 = vector.shape_cast %9 : vector<1x16x4xbf16> to vector<16x4xbf16>
    %cst_11 = arith.constant dense<0.000000e+00> : vector<72x4xf32>
    %11 = tpu.matmul %8, %10, %cst_11 {dimension_numbers = #tpu.dot_dimension_numbers<[1], [0], [0], [1], [0, 0, 1, 1], [], []>} : vector<72x16xbf16>, vector<16x4xbf16>, vector<72x4xf32> -> vector<72x4xf32>
    %12 = arith.addf %6, %11 : vector<72x4xf32>
    %c0_12 = arith.constant 0 : index
    %c9 = arith.constant 9 : index
    %c0_13 = arith.constant 0 : index
    %13 = vector.load %arg1[%c0_12, %c9, %c0_13] : memref<1x82x16xbf16, #tpu.memory_space<vmem>>, vector<1x72x16xbf16>
    %14 = vector.shape_cast %13 : vector<1x72x16xbf16> to vector<72x16xbf16>
    %c2 = arith.constant 2 : index
    %c0_14 = arith.constant 0 : index
    %c0_15 = arith.constant 0 : index
    %15 = vector.load %arg2[%c2, %c0_14, %c0_15] : memref<4x16x4xbf16, #tpu.memory_space<vmem>>, vector<1x16x4xbf16>
    %16 = vector.shape_cast %15 : vector<1x16x4xbf16> to vector<16x4xbf16>
    %cst_16 = arith.constant dense<0.000000e+00> : vector<72x4xf32>
    %17 = tpu.matmul %14, %16, %cst_16 {dimension_numbers = #tpu.dot_dimension_numbers<[1], [0], [0], [1], [0, 0, 1, 1], [], []>} : vector<72x16xbf16>, vector<16x4xbf16>, vector<72x4xf32> -> vector<72x4xf32>
    %18 = arith.addf %12, %17 : vector<72x4xf32>
    %c0_17 = arith.constant 0 : index
    %c10 = arith.constant 10 : index
    %c0_18 = arith.constant 0 : index
    %19 = vector.load %arg1[%c0_17, %c10, %c0_18] : memref<1x82x16xbf16, #tpu.memory_space<vmem>>, vector<1x72x16xbf16>
    %20 = vector.shape_cast %19 : vector<1x72x16xbf16> to vector<72x16xbf16>
    %c3 = arith.constant 3 : index
    %c0_19 = arith.constant 0 : index
    %c0_20 = arith.constant 0 : index
    %21 = vector.load %arg2[%c3, %c0_19, %c0_20] : memref<4x16x4xbf16, #tpu.memory_space<vmem>>, vector<1x16x4xbf16>
    %22 = vector.shape_cast %21 : vector<1x16x4xbf16> to vector<16x4xbf16>
    %cst_21 = arith.constant dense<0.000000e+00> : vector<72x4xf32>
    %23 = tpu.matmul %20, %22, %cst_21 {dimension_numbers = #tpu.dot_dimension_numbers<[1], [0], [0], [1], [0, 0, 1, 1], [], []>} : vector<72x16xbf16>, vector<16x4xbf16>, vector<72x4xf32> -> vector<72x4xf32>
    %24 = arith.addf %18, %23 : vector<72x4xf32>
    %c0_22 = arith.constant 0 : index
    %c0_23 = arith.constant 0 : index
    %25 = vector.load %arg3[%c0_22, %c0_23] : memref<1x4xf32, #tpu.memory_space<vmem>>, vector<1x4xf32>
    %26 = vector.broadcast %25 : vector<1x4xf32> to vector<72x4xf32>
    %27 = arith.addf %24, %26 : vector<72x4xf32>
    %cst_24 = arith.constant 0.000000e+00 : f32
    %28 = vector.broadcast %cst_24 : f32 to vector<72x4xf32>
    %29 = arith.maximumf %27, %28 : vector<72x4xf32>
    %30 = arith.truncf %29 : vector<72x4xf32> to vector<72x4xbf16>
    %c0_25 = arith.constant 0 : index
    %c0_26 = arith.constant 0 : index
    %c0_27 = arith.constant 0 : index
    %31 = vector.load %arg4[%c0_25, %c0_26, %c0_27] : memref<1x72x4xbf16, #tpu.memory_space<vmem>>, vector<1x72x4xbf16>
    %32 = vector.shape_cast %31 : vector<1x72x4xbf16> to vector<72x4xbf16>
    %33 = vector.shape_cast %30 : vector<72x4xbf16> to vector<1x72x4xbf16>
    tpu.vector_store %arg4[%c0_25, %c0_26, %c0_27], %33 {strides = array<i32>} : memref<1x72x4xbf16, #tpu.memory_space<vmem>>, vector<1x72x4xbf16>,
    return
  }
  func.func @transform_0(%arg0: i32) -> (i32, i32, i32) {
    %c0_i32 = arith.constant 0 : i32
    %c0_i32_0 = arith.constant 0 : i32
    %c0_i32_1 = arith.constant 0 : i32
    return %arg0, %c0_i32, %c0_i32_0 : i32, i32, i32
  }
  func.func @transform_1(%arg0: i32) -> (i32, i32, i32) {
    %c0_i32 = arith.constant 0 : i32
    %c0_i32_0 = arith.constant 0 : i32
    %c0_i32_1 = arith.constant 0 : i32
    %c0_i32_2 = arith.constant 0 : i32
    return %c0_i32, %c0_i32_0, %c0_i32_1 : i32, i32, i32
  }
  func.func @transform_2(%arg0: i32) -> (i32, i32) {
    %c0_i32 = arith.constant 0 : i32
    %c0_i32_0 = arith.constant 0 : i32
    %c0_i32_1 = arith.constant 0 : i32
    return %c0_i32, %c0_i32_0 : i32, i32
  }
  func.func @transform_3(%arg0: i32) -> (i32, i32, i32) {
    %c0_i32 = arith.constant 0 : i32
    %c0_i32_0 = arith.constant 0 : i32
    %c0_i32_1 = arith.constant 0 : i32
    return %arg0, %c0_i32, %c0_i32_0 : i32, i32, i32
  }
}

module attributes {stable_mosaic.version = 11 : i64} {
  func.func @_conv_tap_kernel(%arg0: i32, %arg1: memref<1x26x16xbf16, #tpu.memory_space<vmem>>, %arg2: memref<4x16x8xbf16, #tpu.memory_space<vmem>>, %arg3: memref<1x8xf32, #tpu.memory_space<vmem>>, %arg4: memref<1x20x8xbf16, #tpu.memory_space<vmem>>) attributes {dimension_semantics = [#tpu.dimension_semantics<parallel>], iteration_bounds = array<i64: 2>, scalar_prefetch = 0 : i64, scratch_operands = 0 : i64, tpu.core_type = #tpu.core_type<tc>, window_params = [{transform_indices = @transform_0, window_bounds = array<i64: 1, 26, 16>}, {pipeline_mode = #tpu.pipeline_mode<synchronous>, transform_indices = @transform_1, window_bounds = array<i64: 4, 16, 8>}, {pipeline_mode = #tpu.pipeline_mode<synchronous>, transform_indices = @transform_2, window_bounds = array<i64: 1, 8>}, {transform_indices = @transform_3, window_bounds = array<i64: 1, 20, 8>}]} {
    %cst = arith.constant 0.000000e+00 : f32
    %0 = vector.broadcast %cst : f32 to vector<20x8xf32>
    %c0 = arith.constant 0 : index
    %c0_0 = arith.constant 0 : index
    %c0_1 = arith.constant 0 : index
    %1 = vector.load %arg1[%c0, %c0_0, %c0_1] : memref<1x26x16xbf16, #tpu.memory_space<vmem>>, vector<1x20x16xbf16>
    %2 = vector.shape_cast %1 : vector<1x20x16xbf16> to vector<20x16xbf16>
    %c0_2 = arith.constant 0 : index
    %c0_3 = arith.constant 0 : index
    %c0_4 = arith.constant 0 : index
    %3 = vector.load %arg2[%c0_2, %c0_3, %c0_4] : memref<4x16x8xbf16, #tpu.memory_space<vmem>>, vector<1x16x8xbf16>
    %4 = vector.shape_cast %3 : vector<1x16x8xbf16> to vector<16x8xbf16>
    %cst_5 = arith.constant dense<0.000000e+00> : vector<20x8xf32>
    %5 = tpu.matmul %2, %4, %cst_5 {dimension_numbers = #tpu.dot_dimension_numbers<[1], [0], [0], [1], [0, 0, 1, 1], [], []>} : vector<20x16xbf16>, vector<16x8xbf16>, vector<20x8xf32> -> vector<20x8xf32>
    %6 = arith.addf %0, %5 : vector<20x8xf32>
    %c0_6 = arith.constant 0 : index
    %c1 = arith.constant 1 : index
    %c0_7 = arith.constant 0 : index
    %7 = vector.load %arg1[%c0_6, %c1, %c0_7] : memref<1x26x16xbf16, #tpu.memory_space<vmem>>, vector<1x20x16xbf16>
    %8 = vector.shape_cast %7 : vector<1x20x16xbf16> to vector<20x16xbf16>
    %c1_8 = arith.constant 1 : index
    %c0_9 = arith.constant 0 : index
    %c0_10 = arith.constant 0 : index
    %9 = vector.load %arg2[%c1_8, %c0_9, %c0_10] : memref<4x16x8xbf16, #tpu.memory_space<vmem>>, vector<1x16x8xbf16>
    %10 = vector.shape_cast %9 : vector<1x16x8xbf16> to vector<16x8xbf16>
    %cst_11 = arith.constant dense<0.000000e+00> : vector<20x8xf32>
    %11 = tpu.matmul %8, %10, %cst_11 {dimension_numbers = #tpu.dot_dimension_numbers<[1], [0], [0], [1], [0, 0, 1, 1], [], []>} : vector<20x16xbf16>, vector<16x8xbf16>, vector<20x8xf32> -> vector<20x8xf32>
    %12 = arith.addf %6, %11 : vector<20x8xf32>
    %c0_12 = arith.constant 0 : index
    %c5 = arith.constant 5 : index
    %c0_13 = arith.constant 0 : index
    %13 = vector.load %arg1[%c0_12, %c5, %c0_13] : memref<1x26x16xbf16, #tpu.memory_space<vmem>>, vector<1x20x16xbf16>
    %14 = vector.shape_cast %13 : vector<1x20x16xbf16> to vector<20x16xbf16>
    %c2 = arith.constant 2 : index
    %c0_14 = arith.constant 0 : index
    %c0_15 = arith.constant 0 : index
    %15 = vector.load %arg2[%c2, %c0_14, %c0_15] : memref<4x16x8xbf16, #tpu.memory_space<vmem>>, vector<1x16x8xbf16>
    %16 = vector.shape_cast %15 : vector<1x16x8xbf16> to vector<16x8xbf16>
    %cst_16 = arith.constant dense<0.000000e+00> : vector<20x8xf32>
    %17 = tpu.matmul %14, %16, %cst_16 {dimension_numbers = #tpu.dot_dimension_numbers<[1], [0], [0], [1], [0, 0, 1, 1], [], []>} : vector<20x16xbf16>, vector<16x8xbf16>, vector<20x8xf32> -> vector<20x8xf32>
    %18 = arith.addf %12, %17 : vector<20x8xf32>
    %c0_17 = arith.constant 0 : index
    %c6 = arith.constant 6 : index
    %c0_18 = arith.constant 0 : index
    %19 = vector.load %arg1[%c0_17, %c6, %c0_18] : memref<1x26x16xbf16, #tpu.memory_space<vmem>>, vector<1x20x16xbf16>
    %20 = vector.shape_cast %19 : vector<1x20x16xbf16> to vector<20x16xbf16>
    %c3 = arith.constant 3 : index
    %c0_19 = arith.constant 0 : index
    %c0_20 = arith.constant 0 : index
    %21 = vector.load %arg2[%c3, %c0_19, %c0_20] : memref<4x16x8xbf16, #tpu.memory_space<vmem>>, vector<1x16x8xbf16>
    %22 = vector.shape_cast %21 : vector<1x16x8xbf16> to vector<16x8xbf16>
    %cst_21 = arith.constant dense<0.000000e+00> : vector<20x8xf32>
    %23 = tpu.matmul %20, %22, %cst_21 {dimension_numbers = #tpu.dot_dimension_numbers<[1], [0], [0], [1], [0, 0, 1, 1], [], []>} : vector<20x16xbf16>, vector<16x8xbf16>, vector<20x8xf32> -> vector<20x8xf32>
    %24 = arith.addf %18, %23 : vector<20x8xf32>
    %c0_22 = arith.constant 0 : index
    %c0_23 = arith.constant 0 : index
    %25 = vector.load %arg3[%c0_22, %c0_23] : memref<1x8xf32, #tpu.memory_space<vmem>>, vector<1x8xf32>
    %26 = vector.broadcast %25 : vector<1x8xf32> to vector<20x8xf32>
    %27 = arith.addf %24, %26 : vector<20x8xf32>
    %cst_24 = arith.constant 0.000000e+00 : f32
    %28 = vector.broadcast %cst_24 : f32 to vector<20x8xf32>
    %29 = arith.maximumf %27, %28 : vector<20x8xf32>
    %30 = arith.truncf %29 : vector<20x8xf32> to vector<20x8xbf16>
    %c0_25 = arith.constant 0 : index
    %c0_26 = arith.constant 0 : index
    %c0_27 = arith.constant 0 : index
    %31 = vector.load %arg4[%c0_25, %c0_26, %c0_27] : memref<1x20x8xbf16, #tpu.memory_space<vmem>>, vector<1x20x8xbf16>
    %32 = vector.shape_cast %31 : vector<1x20x8xbf16> to vector<20x8xbf16>
    %33 = vector.shape_cast %30 : vector<20x8xbf16> to vector<1x20x8xbf16>
    tpu.vector_store %arg4[%c0_25, %c0_26, %c0_27], %33 {strides = array<i32>} : memref<1x20x8xbf16, #tpu.memory_space<vmem>>, vector<1x20x8xbf16>,
    return
  }
  func.func @transform_0(%arg0: i32) -> (i32, i32, i32) {
    %c0_i32 = arith.constant 0 : i32
    %c0_i32_0 = arith.constant 0 : i32
    %c0_i32_1 = arith.constant 0 : i32
    return %arg0, %c0_i32, %c0_i32_0 : i32, i32, i32
  }
  func.func @transform_1(%arg0: i32) -> (i32, i32, i32) {
    %c0_i32 = arith.constant 0 : i32
    %c0_i32_0 = arith.constant 0 : i32
    %c0_i32_1 = arith.constant 0 : i32
    %c0_i32_2 = arith.constant 0 : i32
    return %c0_i32, %c0_i32_0, %c0_i32_1 : i32, i32, i32
  }
  func.func @transform_2(%arg0: i32) -> (i32, i32) {
    %c0_i32 = arith.constant 0 : i32
    %c0_i32_0 = arith.constant 0 : i32
    %c0_i32_1 = arith.constant 0 : i32
    return %c0_i32, %c0_i32_0 : i32, i32
  }
  func.func @transform_3(%arg0: i32) -> (i32, i32, i32) {
    %c0_i32 = arith.constant 0 : i32
    %c0_i32_0 = arith.constant 0 : i32
    %c0_i32_1 = arith.constant 0 : i32
    return %arg0, %c0_i32, %c0_i32_0 : i32, i32, i32
  }
}

module attributes {stable_mosaic.version = 11 : i64} {
  func.func @_conv_tap_fused_kernel(%arg0: i32, %arg1: memref<1x10x32xbf16, #tpu.memory_space<vmem>>, %arg2: memref<4x32x16xbf16, #tpu.memory_space<vmem>>, %arg3: memref<1x16xf32, #tpu.memory_space<vmem>>, %arg4: memref<16x32xbf16, #tpu.memory_space<vmem>>, %arg5: memref<1x32xf32, #tpu.memory_space<vmem>>, %arg6: memref<1x6x32xbf16, #tpu.memory_space<vmem>>) attributes {dimension_semantics = [#tpu.dimension_semantics<parallel>], iteration_bounds = array<i64: 2>, scalar_prefetch = 0 : i64, scratch_operands = 0 : i64, tpu.core_type = #tpu.core_type<tc>, window_params = [{transform_indices = @transform_0, window_bounds = array<i64: 1, 10, 32>}, {pipeline_mode = #tpu.pipeline_mode<synchronous>, transform_indices = @transform_1, window_bounds = array<i64: 4, 32, 16>}, {pipeline_mode = #tpu.pipeline_mode<synchronous>, transform_indices = @transform_2, window_bounds = array<i64: 1, 16>}, {pipeline_mode = #tpu.pipeline_mode<synchronous>, transform_indices = @transform_3, window_bounds = array<i64: 16, 32>}, {pipeline_mode = #tpu.pipeline_mode<synchronous>, transform_indices = @transform_4, window_bounds = array<i64: 1, 32>}, {transform_indices = @transform_5, window_bounds = array<i64: 1, 6, 32>}]} {
    %cst = arith.constant 0.000000e+00 : f32
    %0 = vector.broadcast %cst : f32 to vector<6x16xf32>
    %c0 = arith.constant 0 : index
    %c0_0 = arith.constant 0 : index
    %c0_1 = arith.constant 0 : index
    %1 = vector.load %arg1[%c0, %c0_0, %c0_1] : memref<1x10x32xbf16, #tpu.memory_space<vmem>>, vector<1x6x32xbf16>
    %2 = vector.shape_cast %1 : vector<1x6x32xbf16> to vector<6x32xbf16>
    %c0_2 = arith.constant 0 : index
    %c0_3 = arith.constant 0 : index
    %c0_4 = arith.constant 0 : index
    %3 = vector.load %arg2[%c0_2, %c0_3, %c0_4] : memref<4x32x16xbf16, #tpu.memory_space<vmem>>, vector<1x32x16xbf16>
    %4 = vector.shape_cast %3 : vector<1x32x16xbf16> to vector<32x16xbf16>
    %cst_5 = arith.constant dense<0.000000e+00> : vector<6x16xf32>
    %5 = tpu.matmul %2, %4, %cst_5 {dimension_numbers = #tpu.dot_dimension_numbers<[1], [0], [0], [1], [0, 0, 1, 1], [], []>} : vector<6x32xbf16>, vector<32x16xbf16>, vector<6x16xf32> -> vector<6x16xf32>
    %6 = arith.addf %0, %5 : vector<6x16xf32>
    %c0_6 = arith.constant 0 : index
    %c1 = arith.constant 1 : index
    %c0_7 = arith.constant 0 : index
    %7 = vector.load %arg1[%c0_6, %c1, %c0_7] : memref<1x10x32xbf16, #tpu.memory_space<vmem>>, vector<1x6x32xbf16>
    %8 = vector.shape_cast %7 : vector<1x6x32xbf16> to vector<6x32xbf16>
    %c1_8 = arith.constant 1 : index
    %c0_9 = arith.constant 0 : index
    %c0_10 = arith.constant 0 : index
    %9 = vector.load %arg2[%c1_8, %c0_9, %c0_10] : memref<4x32x16xbf16, #tpu.memory_space<vmem>>, vector<1x32x16xbf16>
    %10 = vector.shape_cast %9 : vector<1x32x16xbf16> to vector<32x16xbf16>
    %cst_11 = arith.constant dense<0.000000e+00> : vector<6x16xf32>
    %11 = tpu.matmul %8, %10, %cst_11 {dimension_numbers = #tpu.dot_dimension_numbers<[1], [0], [0], [1], [0, 0, 1, 1], [], []>} : vector<6x32xbf16>, vector<32x16xbf16>, vector<6x16xf32> -> vector<6x16xf32>
    %12 = arith.addf %6, %11 : vector<6x16xf32>
    %c0_12 = arith.constant 0 : index
    %c3 = arith.constant 3 : index
    %c0_13 = arith.constant 0 : index
    %13 = vector.load %arg1[%c0_12, %c3, %c0_13] : memref<1x10x32xbf16, #tpu.memory_space<vmem>>, vector<1x6x32xbf16>
    %14 = vector.shape_cast %13 : vector<1x6x32xbf16> to vector<6x32xbf16>
    %c2 = arith.constant 2 : index
    %c0_14 = arith.constant 0 : index
    %c0_15 = arith.constant 0 : index
    %15 = vector.load %arg2[%c2, %c0_14, %c0_15] : memref<4x32x16xbf16, #tpu.memory_space<vmem>>, vector<1x32x16xbf16>
    %16 = vector.shape_cast %15 : vector<1x32x16xbf16> to vector<32x16xbf16>
    %cst_16 = arith.constant dense<0.000000e+00> : vector<6x16xf32>
    %17 = tpu.matmul %14, %16, %cst_16 {dimension_numbers = #tpu.dot_dimension_numbers<[1], [0], [0], [1], [0, 0, 1, 1], [], []>} : vector<6x32xbf16>, vector<32x16xbf16>, vector<6x16xf32> -> vector<6x16xf32>
    %18 = arith.addf %12, %17 : vector<6x16xf32>
    %c0_17 = arith.constant 0 : index
    %c4 = arith.constant 4 : index
    %c0_18 = arith.constant 0 : index
    %19 = vector.load %arg1[%c0_17, %c4, %c0_18] : memref<1x10x32xbf16, #tpu.memory_space<vmem>>, vector<1x6x32xbf16>
    %20 = vector.shape_cast %19 : vector<1x6x32xbf16> to vector<6x32xbf16>
    %c3_19 = arith.constant 3 : index
    %c0_20 = arith.constant 0 : index
    %c0_21 = arith.constant 0 : index
    %21 = vector.load %arg2[%c3_19, %c0_20, %c0_21] : memref<4x32x16xbf16, #tpu.memory_space<vmem>>, vector<1x32x16xbf16>
    %22 = vector.shape_cast %21 : vector<1x32x16xbf16> to vector<32x16xbf16>
    %cst_22 = arith.constant dense<0.000000e+00> : vector<6x16xf32>
    %23 = tpu.matmul %20, %22, %cst_22 {dimension_numbers = #tpu.dot_dimension_numbers<[1], [0], [0], [1], [0, 0, 1, 1], [], []>} : vector<6x32xbf16>, vector<32x16xbf16>, vector<6x16xf32> -> vector<6x16xf32>
    %24 = arith.addf %18, %23 : vector<6x16xf32>
    %c0_23 = arith.constant 0 : index
    %c0_24 = arith.constant 0 : index
    %25 = vector.load %arg3[%c0_23, %c0_24] : memref<1x16xf32, #tpu.memory_space<vmem>>, vector<1x16xf32>
    %26 = vector.broadcast %25 : vector<1x16xf32> to vector<6x16xf32>
    %27 = arith.addf %24, %26 : vector<6x16xf32>
    %cst_25 = arith.constant 0.000000e+00 : f32
    %28 = vector.broadcast %cst_25 : f32 to vector<6x16xf32>
    %29 = arith.maximumf %27, %28 : vector<6x16xf32>
    %30 = arith.truncf %29 : vector<6x16xf32> to vector<6x16xbf16>
    %c0_26 = arith.constant 0 : index
    %c0_27 = arith.constant 0 : index
    %31 = vector.load %arg4[%c0_26, %c0_27] : memref<16x32xbf16, #tpu.memory_space<vmem>>, vector<16x32xbf16>
    %cst_28 = arith.constant dense<0.000000e+00> : vector<6x32xf32>
    %32 = tpu.matmul %30, %31, %cst_28 {dimension_numbers = #tpu.dot_dimension_numbers<[1], [0], [0], [1], [0, 0, 1, 1], [], []>} : vector<6x16xbf16>, vector<16x32xbf16>, vector<6x32xf32> -> vector<6x32xf32>
    %c0_29 = arith.constant 0 : index
    %c0_30 = arith.constant 0 : index
    %33 = vector.load %arg5[%c0_29, %c0_30] : memref<1x32xf32, #tpu.memory_space<vmem>>, vector<1x32xf32>
    %34 = vector.broadcast %33 : vector<1x32xf32> to vector<6x32xf32>
    %35 = arith.addf %32, %34 : vector<6x32xf32>
    %36 = arith.truncf %35 : vector<6x32xf32> to vector<6x32xbf16>
    %c0_31 = arith.constant 0 : index
    %c0_32 = arith.constant 0 : index
    %c0_33 = arith.constant 0 : index
    %37 = vector.load %arg6[%c0_31, %c0_32, %c0_33] : memref<1x6x32xbf16, #tpu.memory_space<vmem>>, vector<1x6x32xbf16>
    %38 = vector.shape_cast %37 : vector<1x6x32xbf16> to vector<6x32xbf16>
    %39 = vector.shape_cast %36 : vector<6x32xbf16> to vector<1x6x32xbf16>
    tpu.vector_store %arg6[%c0_31, %c0_32, %c0_33], %39 {strides = array<i32>} : memref<1x6x32xbf16, #tpu.memory_space<vmem>>, vector<1x6x32xbf16>,
    return
  }
  func.func @transform_0(%arg0: i32) -> (i32, i32, i32) {
    %c0_i32 = arith.constant 0 : i32
    %c0_i32_0 = arith.constant 0 : i32
    %c0_i32_1 = arith.constant 0 : i32
    return %arg0, %c0_i32, %c0_i32_0 : i32, i32, i32
  }
  func.func @transform_1(%arg0: i32) -> (i32, i32, i32) {
    %c0_i32 = arith.constant 0 : i32
    %c0_i32_0 = arith.constant 0 : i32
    %c0_i32_1 = arith.constant 0 : i32
    %c0_i32_2 = arith.constant 0 : i32
    return %c0_i32, %c0_i32_0, %c0_i32_1 : i32, i32, i32
  }
  func.func @transform_2(%arg0: i32) -> (i32, i32) {
    %c0_i32 = arith.constant 0 : i32
    %c0_i32_0 = arith.constant 0 : i32
    %c0_i32_1 = arith.constant 0 : i32
    return %c0_i32, %c0_i32_0 : i32, i32
  }
  func.func @transform_3(%arg0: i32) -> (i32, i32) {
    %c0_i32 = arith.constant 0 : i32
    %c0_i32_0 = arith.constant 0 : i32
    %c0_i32_1 = arith.constant 0 : i32
    return %c0_i32, %c0_i32_0 : i32, i32
  }
  func.func @transform_4(%arg0: i32) -> (i32, i32) {
    %c0_i32 = arith.constant 0 : i32
    %c0_i32_0 = arith.constant 0 : i32
    %c0_i32_1 = arith.constant 0 : i32
    return %c0_i32, %c0_i32_0 : i32, i32
  }
  func.func @transform_5(%arg0: i32) -> (i32, i32, i32) {
    %c0_i32 = arith.constant 0 : i32
    %c0_i32_0 = arith.constant 0 : i32
    %c0_i32_1 = arith.constant 0 : i32
    return %arg0, %c0_i32, %c0_i32_0 : i32, i32, i32
  }
}

</mosaic_0001>

<llo_original>
// kernel: early_cnn_forward.3
$region0: #{early_cnn_forward.3}
  #allocation0 [shape = 'u32[]', space=smem, size = 0x4, offset = 0x4, fixed_abs, tag = 'smem constant byte address 0x4 - core index']
  #allocation1 [shape = 'u32[144,128]{1,0:T(1,128)}', space=vmem, size = 0x12000, scoped, tag = 'internal scratch']
  %s0 = inlined_call_operand.vmem [shape: bf16[2,82,16], index: 0, kind: input, shape index: {}]
  %s1 = inlined_call_operand.vmem [shape: bf16[4,16,4], index: 1, kind: input, shape index: {}]
  %s2 = inlined_call_operand.vmem [shape: f32[1,4], index: 2, kind: input, shape index: {}]
  %s3 = inlined_call_operand.vmem [shape: bf16[2,72,4], index: 3, kind: output, shape index: {}]
  %s4 = sld [smem:[#allocation0]]
  $region45: #{early_cnn_forward.3} parent=0
    _
  %s6 = ssub.s32 1, %s4
  %s7 = scalar_select 0, %s6, %s4
  loop: start=0, step=1, limit=4
  $region2: #{early_cnn_forward.3} parent=0 // loop_pre_header
    _
  $region3: #{early_cnn_forward.3} parent=0 // loop_header
    %s9 = sphi 0, %s13
    %p10 = scmp.ge.s32.totalorder %s9, 4
    %s19 = sphi 0, %s21
    %s22 = sphi 0, %s19
    %s23 = sphi 0, %s22
    %s39 = sphi 0, %s23
    %s43 = sphi 0, %s43
    %s45 = sphi 0, %s43
    %s46 = sphi 0, %s45
    %s60 = sphi 0, %s46
    %s64 = sphi 0, %s64
    %s66 = sphi 0, %s64
    %s67 = sphi 0, %s66
    %s81 = sphi 0, %s67
    %s87 = sphi 0, %s89
    %s90 = sphi 0, %s87
    %s91 = sphi 0, %s90
    %s107 = sphi 0, %s91
  $region4: #{early_cnn_forward.3} parent=0 // loop_header_branch
    %12 = sbr.rel (%p10) target = $region8
  $region5: #{early_cnn_forward.3} parent=0 // loop_body
    %s14 = ssub.s32 %s9, 1
    %s15 = ssub.s32 %s9, 2
    %s16 = sadd.s32 %s9, 1
    %s17 = ssub.s32 %s9, %s16
    %p18 = scmp.eq.s32.totalorder %s17, 0
    %s20 = sadd.s32 %s19, 1
    %s21 = scalar_select %p18, %s19, %s20
    %p24 = pneg %p18
    %p25 = scmp.eq.s32.totalorder %s9, 1
    %p26 = por %p24, %p25
    %p27 = scmp.ne.s32.totalorder %s19, %s22
    %p28 = scmp.eq.s32.totalorder %s9, 0
    %p29 = por %p27, %p28
    %p30 = scmp.ne.s32.totalorder %s19, %s22
    %p31 = scmp.eq.s32.totalorder %s14, 1
    %p32 = por %p30, %p31
    %p33 = scmp.ne.s32.totalorder %s22, %s23
    %p34 = scmp.eq.s32.totalorder %s14, 0
    %p35 = por %p33, %p34
    %p36 = scmp.ne.s32.totalorder %s22, %s23
    %p37 = scmp.eq.s32.totalorder %s15, 1
    %p38 = por %p36, %p37
    %p40 = scmp.ne.s32.totalorder %s23, %s39
    %p41 = scmp.eq.s32.totalorder %s15, 0
    %p42 = por %p40, %p41
    %s44 = sadd.s32 %s43, 1
    %p47 = scmp.eq.s32.totalorder %s9, 1
    %p48 = scmp.ne.s32.totalorder %s43, %s45
    %p49 = scmp.eq.s32.totalorder %s9, 0
    %p50 = por %p48, %p49
    %p51 = scmp.ne.s32.totalorder %s43, %s45
    %p52 = scmp.eq.s32.totalorder %s14, 1
    %p53 = por %p51, %p52
    %p54 = scmp.ne.s32.totalorder %s45, %s46
    %p55 = scmp.eq.s32.totalorder %s14, 0
    %p56 = por %p54, %p55
    %p57 = scmp.ne.s32.totalorder %s45, %s46
    %p58 = scmp.eq.s32.totalorder %s15, 1
    %p59 = por %p57, %p58
    %p61 = scmp.ne.s32.totalorder %s46, %s60
    %p62 = scmp.eq.s32.totalorder %s15, 0
    %p63 = por %p61, %p62
    %s65 = sadd.s32 %s64, 1
    %p68 = scmp.eq.s32.totalorder %s9, 1
    %p69 = scmp.ne.s32.totalorder %s64, %s66
    %p70 = scmp.eq.s32.totalorder %s9, 0
    %p71 = por %p69, %p70
    %p72 = scmp.ne.s32.totalorder %s64, %s66
    %p73 = scmp.eq.s32.totalorder %s14, 1
    %p74 = por %p72, %p73
    %p75 = scmp.ne.s32.totalorder %s66, %s67
    %p76 = scmp.eq.s32.totalorder %s14, 0
    %p77 = por %p75, %p76
    %p78 = scmp.ne.s32.totalorder %s66, %s67
    %p79 = scmp.eq.s32.totalorder %s15, 1
    %p80 = por %p78, %p79
    %p82 = scmp.ne.s32.totalorder %s67, %s81
    %p83 = scmp.eq.s32.totalorder %s15, 0
    %p84 = por %p82, %p83
    %s85 = ssub.s32 %s9, %s16
    %p86 = scmp.eq.s32.totalorder %s85, 0
    %s88 = sadd.s32 %s87, 1
    %s89 = scalar_select %p86, %s87, %s88
    %p92 = pneg %p86
    %p93 = scmp.eq.s32.totalorder %s9, 1
    %p94 = por %p92, %p93
    %p95 = scmp.ne.s32.totalorder %s87, %s90
    %p96 = scmp.eq.s32.totalorder %s9, 0
    %p97 = por %p95, %p96
    %p98 = scmp.ne.s32.totalorder %s87, %s90
    %p99 = scmp.eq.s32.totalorder %s14, 1
    %p100 = por %p98, %p99
    %p101 = scmp.ne.s32.totalorder %s90, %s91
    %p102 = scmp.eq.s32.totalorder %s14, 0
    %p103 = por %p101, %p102
    %p104 = scmp.ne.s32.totalorder %s90, %s91
    %p105 = scmp.eq.s32.totalorder %s15, 1
    %p106 = por %p104, %p105
    %p108 = scmp.ne.s32.totalorder %s91, %s107
    %p109 = scmp.eq.s32.totalorder %s15, 0
    %p110 = por %p108, %p109
    %p111 = scmp.le.s32.totalorder 1, %s9
    %p112 = scmp.lt.s32.totalorder %s9, 3
    %p113 = pnand %p111, %p112
    %p114 = pneg %p113
    // Predicated region
    $region9: #{early_cnn_forward.3} parent=5 // pred_check
      _
    $region10: #{early_cnn_forward.3} parent=5 // pred_check_branch
      %116 = sbr.rel (%p113) target = $region12
    $region11: #{early_cnn_forward.3} parent=5 // pred_region
      %s117 = ssub.s32 %s9, 1
      // Predicated region
      $region13: #{early_cnn_forward.3} parent=11 // pred_check
        %p118 = pneg %p56
      $region14: #{early_cnn_forward.3} parent=11 // pred_check_branch
        %120 = sbr.rel (%p118) target = $region16
      $region15: #{early_cnn_forward.3} parent=11 // pred_region
        _
      $region16: #{early_cnn_forward.3} parent=11 // pred_fallthru
        _
      // Predicated region
      $region17: #{early_cnn_forward.3} parent=11 // pred_check
        %p121 = pneg %p77
      $region18: #{early_cnn_forward.3} parent=11 // pred_check_branch
        %123 = sbr.rel (%p121) target = $region20
      $region19: #{early_cnn_forward.3} parent=11 // pred_region
        _
      $region20: #{early_cnn_forward.3} parent=11 // pred_fallthru
        _
    $region12: #{early_cnn_forward.3} parent=5 // pred_fallthru
      _
    %p124 = scmp.lt.s32.totalorder %s9, 2
    // Predicated region
    $region21: #{early_cnn_forward.3} parent=5 // pred_check
      %p125 = pneg %p124
    $region22: #{early_cnn_forward.3} parent=5 // pred_check_branch
      %127 = sbr.rel (%p125) target = $region24
    $region23: #{early_cnn_forward.3} parent=5 // pred_region
      // Predicated region
      $region25: #{early_cnn_forward.3} parent=23 // pred_check
        %p128 = pneg %p29
      $region26: #{early_cnn_forward.3} parent=23 // pred_check_branch
        %130 = sbr.rel (%p128) target = $region28
      $region27: #{early_cnn_forward.3} parent=23 // pred_region
        %p131 = scmp.lt.s32.totalorder %s9, 1
        %s132 = scalar_select %p131, %s9, 1
        %s133 = smul.addr %s132, 11
        %s134 = smul.addr %s133, 4
        %s135 = scalar_lea.vmem %s0, %s134
      $region28: #{early_cnn_forward.3} parent=23 // pred_fallthru
        _
    $region24: #{early_cnn_forward.3} parent=5 // pred_fallthru
      _
    %p136 = scmp.le.s32.totalorder 1, %s9
    %p137 = scmp.lt.s32.totalorder %s9, 3
    %p138 = pnand %p136, %p137
    %p139 = pneg %p138
    // Predicated region
    $region29: #{early_cnn_forward.3} parent=5 // pred_check
      _
    $region30: #{early_cnn_forward.3} parent=5 // pred_check_branch
      %141 = sbr.rel (%p138) target = $region32
    $region31: #{early_cnn_forward.3} parent=5 // pred_region
      %s142 = ssub.s32 %s9, 1
      %p143 = scmp.lt.s32.totalorder %s14, 1
      %s144 = scalar_select %p143, %s14, 1
      %s145 = smul.addr %s144, 11
      %s146 = smul.addr %s145, 4
      %s147 = scalar_lea.vmem %s0, %s146
      %p148 = pneg %p35
      %p149 = pneg %p32
      %p150 = pneg %p56
      %p151 = pneg %p53
      %p152 = pneg %p77
      %p153 = pneg %p74
      %p154 = pneg %p103
      %p155 = pneg %p100
      %p156 = scmp.lt.s32.totalorder %s14, 1
      %s157 = scalar_select %p156, %s14, 1
      %s158 = smul.addr %s157, 9
      %s159 = smul.addr %s158, 4
      %s160 = scalar_lea.vmem %s3, %s159
      %p161 = scmp.lt.s32.totalorder %s14, 1
      %s162 = scalar_select %p161, %s14, 1
      %s163 = smul.addr %s162, 11
      %s164 = smul.addr %s163, 4
      %s165 = scalar_lea.vmem %s0, %s164
      %p166 = scmp.lt.s32.totalorder %s14, 1
      %s167 = scalar_select %p166, %s14, 1
      %s168 = smul.addr %s167, 9
      %s169 = smul.addr %s168, 4
      %s170 = scalar_lea.vmem %s3, %s169
      %v172 = vld [vmem:[%s165] sm:$0xf]
      %v173 = vld [vmem:[%s165 + $0x4] sm:$0xf]
      %v174 = vld [vmem:[%s165 + $0x8] sm:$0xf]
      %v175 = vld [vmem:[%s165 + $0xc] sm:$0xf]
      %v176 = vld [vmem:[%s165 + $0x10] sm:$0xf]
      %v177 = vld [vmem:[%s165 + $0x14] sm:$0xf]
      %v178 = vld [vmem:[%s165 + $0x18] sm:$0xf]
      %v179 = vld [vmem:[%s165 + $0x1c] sm:$0xf]
      %v180 = vld [vmem:[%s165 + $0x20] sm:$0xf]
      %v181 = vld [vmem:[%s1] sm:$0xf]
      %v182 = vld [vmem:[%s1 + $0x4] sm:$0xf]
      %v183 = vld [vmem:[%s165 + $0x24] sm:$0x1]
      %s184 = scalar_lea.vmem %s1, 8
      %v185 = vld [vmem:[%s184] sm:$0xf]
      %v186 = vld [vmem:[%s184 + $0x4] sm:$0xf]
      %v197 = vunpack.c.l.b16 %v172
      %v198 = vunpack.c.l.b16 %v173
      %v199 = vunpack.c.l.b16 %v174
      %v200 = vunpack.c.l.b16 %v175
      %v201 = vunpack.c.l.b16 %v176
      %v202 = vunpack.c.l.b16 %v177
      %v203 = vunpack.c.l.b16 %v178
      %v204 = vunpack.c.l.b16 %v179
      %v205 = vunpack.c.l.b16 %v180
      %v206 = vunpack.c.l.b16 %v183
      %v207 = vpack.c.b16 %v198, %v197
      %v208 = vpack.c.b16 %v200, %v199
      %v209 = vpack.c.b16 %v202, %v201
      %v210 = vpack.c.b16 %v204, %v203
      %v211 = vpack.c.b16 %v206, %v205
      %vm212 = vsmask.f32 7424
      %v214 = vshrl.u32 %v207, 16
      %v216 = vshll.u32 %v207, 16
      %v218 = vrot.slane %v216, 1
      %v219 = vor.u32 %v214, %v218
      %v221 = vshll.u32 %v208, 16
      %v223 = vrot.slane %v221, 1
      %v224 = vsel %vm212, %v219, %v223
      %v225 = vshrl.u32 %v208, 16
      %v227 = vor.u32 %v225, %v223
      %v229 = vshll.u32 %v209, 16
      %v231 = vrot.slane %v229, 1
      %v232 = vsel %vm212, %v227, %v231
      %v233 = vshrl.u32 %v209, 16
      %v235 = vor.u32 %v233, %v231
      %v237 = vshll.u32 %v210, 16
      %v239 = vrot.slane %v237, 1
      %v240 = vsel %vm212, %v235, %v239
      %v241 = vshrl.u32 %v210, 16
      %v243 = vor.u32 %v241, %v239
      %v245 = vshll.u32 %v211, 16
      %v247 = vrot.slane %v245, 1
      %v248 = vsel %vm212, %v243, %v247
      %v249 = vshrl.u32 %v211, 16
      %v251 = vor.u32 %v249, %v247
      %v254 = vunpack.c.l.b16 %v185
      %v255 = vunpack.c.l.b16 %v186
      %v256 = vpack.c.b16 %v255, %v254
      %vm258 = vcmask 130048
      %v260 = vsel %vm258, %v224, 0
      %v263 = vsel %vm258, %v232, 0
      %v266 = vsel %vm258, %v240, 0
      %v269 = vsel %vm258, %v248, 0
      %v272 = vsel %vm258, %v251, 0
      %274 = vmatprep.subr.bf16.mxu0 0
      %275 = vmatpush1.bf16.msra.mxu0 0
      %276 = vmatprep.subr.bf16.mxu0 0
      %277 = vmatpush1.bf16.msra.mxu0 0
      %278 = vmatprep.subr.bf16.mxu0 0
      %279 = vmatpush1.bf16.msra.mxu0 0
      %280 = vmatprep.subr.bf16.mxu0 0
      %281 = vmatpush1.bf16.msra.mxu0 0
      %282 = vmatprep.subr.bf16.mxu0 0
      %283 = vmatpush1.bf16.msra.mxu0 0
      %284 = vmatprep.subr.bf16.mxu0 0
      %285 = vmatpush1.bf16.msra.mxu0 0
      %286 = vmatprep.subr.bf16.mxu0 0
      %287 = vmatpush1.bf16.msra.mxu0 0
      %288 = vmatprep.subr.bf16.mxu0 0
      %289 = vmatpush1.bf16.msra.mxu0 %v256
      %290 = vmatprep.subr.bf16.mxu0 0
      %291 = vmatpush2.bf16.msra.mxu0 0
      %292 = vmatprep.subr.bf16.mxu0 0
      %293 = vmatpush2.bf16.msra.mxu0 0
      %294 = vmatprep.subr.bf16.mxu0 0
      %295 = vmatpush2.bf16.msra.mxu0 0
      %296 = vmatprep.subr.bf16.mxu0 0
      %297 = vmatpush2.bf16.msra.mxu0 0
      %298 = vmatprep.subr.bf16.mxu0 0
      %299 = vmatpush2.bf16.msra.mxu0 0
      %300 = vmatprep.subr.bf16.mxu0 0
      %301 = vmatpush2.bf16.msra.mxu0 0
      %302 = vmatprep.subr.bf16.mxu0 0
      %303 = vmatpush2.bf16.msra.mxu0 0
      %304 = vmatprep.subr.bf16.mxu0 0
      %305 = vmatpush2.bf16.msra.mxu0 0
      %306 = vmatprep.mubr.bf16.mxu0 0
      %307 = vmatmul.mubr.bf16.gmra.mxu0 %v260
      %v308 = vpop.f32.mrf.mxu0
      %v309 = vadd.f32 0.0, %v308
      %v310 = vpop.f32.mrf.mxu0
      %v311 = vpop.f32.mrf.mxu0
      %v312 = vadd.f32 0.0, %v311
      %v313 = vpop.f32.mrf.mxu0
      %314 = vmatprep.mubr.bf16.mxu0 0
      %315 = vmatmul.mubr.bf16.gmra.mxu0 %v263
      %v316 = vpop.f32.mrf.mxu0
      %v317 = vadd.f32 0.0, %v316
      %v318 = vpop.f32.mrf.mxu0
      %v319 = vpop.f32.mrf.mxu0
      %v320 = vadd.f32 0.0, %v319
      %v321 = vpop.f32.mrf.mxu0
      %322 = vmatprep.mubr.bf16.mxu0 0
      %323 = vmatmul.mubr.bf16.gmra.mxu0 %v266
      %v324 = vpop.f32.mrf.mxu0
      %v325 = vadd.f32 0.0, %v324
      %v326 = vpop.f32.mrf.mxu0
      %v327 = vpop.f32.mrf.mxu0
      %v328 = vadd.f32 0.0, %v327
      %v329 = vpop.f32.mrf.mxu0
      %330 = vmatprep.mubr.bf16.mxu0 0
      %331 = vmatmul.mubr.bf16.gmra.mxu0 %v269
      %v332 = vpop.f32.mrf.mxu0
      %v333 = vadd.f32 0.0, %v332
      %v334 = vpop.f32.mrf.mxu0
      %v335 = vpop.f32.mrf.mxu0
      %v336 = vadd.f32 0.0, %v335
      %v337 = vpop.f32.mrf.mxu0
      %338 = vmatprep.mubr.bf16.mxu0 0
      %339 = vmatmul.mubr.bf16.gmra.mxu0 %v272
      %v340 = vpop.f32.mrf.mxu0
      %v341 = vadd.f32 0.0, %v340
      %v342 = vpop.f32.mrf.mxu0
      %v343 = vpop.f32.mrf.mxu0
      %v344 = vpop.f32.mrf.mxu0
      %345 = vdwg.mxu0
      %v346 = vpack.c.b16 %v205, %v205
      %v349 = vunpack.c.l.b16 %v181
      %v350 = vunpack.c.l.b16 %v182
      %v351 = vpack.c.b16 %v350, %v349
      %v353 = vsel %vm258, %v207, 0
      %v355 = vsel %vm258, %v208, 0
      %v357 = vsel %vm258, %v209, 0
      %v359 = vsel %vm258, %v210, 0
      %v362 = vsel %vm258, %v346, 0
      %364 = vmatprep.subr.bf16.mxu0 0
      %365 = vmatpush1.bf16.msra.mxu0 0
      %366 = vmatprep.subr.bf16.mxu0 0
      %367 = vmatpush1.bf16.msra.mxu0 0
      %368 = vmatprep.subr.bf16.mxu0 0
      %369 = vmatpush1.bf16.msra.mxu0 0
      %370 = vmatprep.subr.bf16.mxu0 0
      %371 = vmatpush1.bf16.msra.mxu0 0
      %372 = vmatprep.subr.bf16.mxu0 0
      %373 = vmatpush1.bf16.msra.mxu0 0
      %374 = vmatprep.subr.bf16.mxu0 0
      %375 = vmatpush1.bf16.msra.mxu0 0
      %376 = vmatprep.subr.bf16.mxu0 0
      %377 = vmatpush1.bf16.msra.mxu0 0
      %378 = vmatprep.subr.bf16.mxu0 0
      %379 = vmatpush1.bf16.msra.mxu0 %v351
      %380 = vmatprep.subr.bf16.mxu0 0
      %381 = vmatpush2.bf16.msra.mxu0 0
      %382 = vmatprep.subr.bf16.mxu0 0
      %383 = vmatpush2.bf16.msra.mxu0 0
      %384 = vmatprep.subr.bf16.mxu0 0
      %385 = vmatpush2.bf16.msra.mxu0 0
      %386 = vmatprep.subr.bf16.mxu0 0
      %387 = vmatpush2.bf16.msra.mxu0 0
      %388 = vmatprep.subr.bf16.mxu0 0
      %389 = vmatpush2.bf16.msra.mxu0 0
      %390 = vmatprep.subr.bf16.mxu0 0
      %391 = vmatpush2.bf16.msra.mxu0 0
      %392 = vmatprep.subr.bf16.mxu0 0
      %393 = vmatpush2.bf16.msra.mxu0 0
      %394 = vmatprep.subr.bf16.mxu0 0
      %395 = vmatpush2.bf16.msra.mxu0 0
      %396 = vmatprep.mubr.bf16.mxu0 0
      %397 = vmatmul.mubr.bf16.gmra.mxu0 %v353
      %v398 = vpop.f32.mrf.mxu0
      %v399 = vadd.f32 %v309, %v398
      %v400 = vpop.f32.mrf.mxu0
      %v401 = vpop.f32.mrf.mxu0
      %v402 = vadd.f32 %v312, %v401
      %v403 = vpop.f32.mrf.mxu0
      %404 = vmatprep.mubr.bf16.mxu0 0
      %405 = vmatmul.mubr.bf16.gmra.mxu0 %v355
      %v406 = vpop.f32.mrf.mxu0
      %v407 = vadd.f32 %v317, %v406
      %v408 = vpop.f32.mrf.mxu0
      %v409 = vpop.f32.mrf.mxu0
      %v410 = vadd.f32 %v320, %v409
      %v411 = vpop.f32.mrf.mxu0
      %412 = vmatprep.mubr.bf16.mxu0 0
      %413 = vmatmul.mubr.bf16.gmra.mxu0 %v357
      %v414 = vpop.f32.mrf.mxu0
      %v415 = vadd.f32 %v325, %v414
      %v416 = vpop.f32.mrf.mxu0
      %v417 = vpop.f32.mrf.mxu0
      %v418 = vadd.f32 %v328, %v417
      %v419 = vpop.f32.mrf.mxu0
      %420 = vmatprep.mubr.bf16.mxu0 0
      %421 = vmatmul.mubr.bf16.gmra.mxu0 %v359
      %v422 = vpop.f32.mrf.mxu0
      %v423 = vadd.f32 %v333, %v422
      %v424 = vpop.f32.mrf.mxu0
      %v425 = vpop.f32.mrf.mxu0
      %v426 = vadd.f32 %v336, %v425
      %v427 = vpop.f32.mrf.mxu0
      %428 = vmatprep.mubr.bf16.mxu0 0
      %429 = vmatmul.mubr.bf16.gmra.mxu0 %v362
      %v430 = vpop.f32.mrf.mxu0
      %v431 = vadd.f32 %v341, %v430
      %v432 = vpop.f32.mrf.mxu0
      %v433 = vpop.f32.mrf.mxu0
      %v434 = vpop.f32.mrf.mxu0
      %435 = vdwg.mxu0
      %v436 = vld [vmem:[%s165 + $0x4] sm:$0xf]
      %v437 = vld [vmem:[%s165 + $0x8] sm:$0xf]
      %v438 = vld [vmem:[%s165 + $0xc] sm:$0xf]
      %v439 = vld [vmem:[%s165 + $0x10] sm:$0xf]
      %v440 = vld [vmem:[%s165 + $0x14] sm:$0xf]
      %v441 = vld [vmem:[%s165 + $0x18] sm:$0xf]
      %v442 = vld [vmem:[%s165 + $0x1c] sm:$0xf]
      %v443 = vld [vmem:[%s165 + $0x20] sm:$0xf]
      %v444 = vld [vmem:[%s165 + $0x24] sm:$0xf]
      %v445 = vld [vmem:[%s165 + $0x28] sm:$0x1]
      %s446 = scalar_lea.vmem %s1, 16
      %v447 = vld [vmem:[%s446] sm:$0xf]
      %v448 = vld [vmem:[%s446 + $0x4] sm:$0xf]
      %v459 = vunpack.c.l.b16 %v436
      %v460 = vunpack.c.l.b16 %v437
      %v461 = vunpack.c.l.b16 %v438
      %v462 = vunpack.c.l.b16 %v439
      %v463 = vunpack.c.l.b16 %v440
      %v464 = vunpack.c.l.b16 %v441
      %v465 = vunpack.c.l.b16 %v442
      %v466 = vunpack.c.l.b16 %v443
      %v467 = vunpack.c.l.b16 %v444
      %v468 = vunpack.c.l.b16 %v445
      %v469 = vpack.c.b16 %v460, %v459
      %v470 = vpack.c.b16 %v462, %v461
      %v471 = vpack.c.b16 %v464, %v463
      %v472 = vpack.c.b16 %v466, %v465
      %v473 = vpack.c.b16 %v468, %v467
      %v475 = vshrl.u32 %v469, 16
      %v477 = vshll.u32 %v469, 16
      %v479 = vrot.slane %v477, 1
      %v480 = vor.u32 %v475, %v479
      %v482 = vshll.u32 %v470, 16
      %v484 = vrot.slane %v482, 1
      %v485 = vsel %vm212, %v480, %v484
      %v486 = vshrl.u32 %v470, 16
      %v488 = vor.u32 %v486, %v484
      %v490 = vshll.u32 %v471, 16
      %v492 = vrot.slane %v490, 1
      %v493 = vsel %vm212, %v488, %v492
      %v494 = vshrl.u32 %v471, 16
      %v496 = vor.u32 %v494, %v492
      %v498 = vshll.u32 %v472, 16
      %v500 = vrot.slane %v498, 1
      %v501 = vsel %vm212, %v496, %v500
      %v502 = vshrl.u32 %v472, 16
      %v504 = vor.u32 %v502, %v500
      %v506 = vshll.u32 %v473, 16
      %v508 = vrot.slane %v506, 1
      %v509 = vsel %vm212, %v504, %v508
      %v510 = vshrl.u32 %v473, 16
      %v512 = vor.u32 %v510, %v508
      %v515 = vunpack.c.l.b16 %v447
      %v516 = vunpack.c.l.b16 %v448
      %v517 = vpack.c.b16 %v516, %v515
      %v520 = vsel %vm258, %v485, 0
      %v523 = vsel %vm258, %v493, 0
      %v526 = vsel %vm258, %v501, 0
      %v529 = vsel %vm258, %v509, 0
      %v532 = vsel %vm258, %v512, 0
      %534 = vmatprep.subr.bf16.mxu0 0
      %535 = vmatpush1.bf16.msra.mxu0 0
      %536 = vmatprep.subr.bf16.mxu0 0
      %537 = vmatpush1.bf16.msra.mxu0 0
      %538 = vmatprep.subr.bf16.mxu0 0
      %539 = vmatpush1.bf16.msra.mxu0 0
      %540 = vmatprep.subr.bf16.mxu0 0
      %541 = vmatpush1.bf16.msra.mxu0 0
      %542 = vmatprep.subr.bf16.mxu0 0
      %543 = vmatpush1.bf16.msra.mxu0 0
      %544 = vmatprep.subr.bf16.mxu0 0
      %545 = vmatpush1.bf16.msra.mxu0 0
      %546 = vmatprep.subr.bf16.mxu0 0
      %547 = vmatpush1.bf16.msra.mxu0 0
      %548 = vmatprep.subr.bf16.mxu0 0
      %549 = vmatpush1.bf16.msra.mxu0 %v517
      %550 = vmatprep.subr.bf16.mxu0 0
      %551 = vmatpush2.bf16.msra.mxu0 0
      %552 = vmatprep.subr.bf16.mxu0 0
      %553 = vmatpush2.bf16.msra.mxu0 0
      %554 = vmatprep.subr.bf16.mxu0 0
      %555 = vmatpush2.bf16.msra.mxu0 0
      %556 = vmatprep.subr.bf16.mxu0 0
      %557 = vmatpush2.bf16.msra.mxu0 0
      %558 = vmatprep.subr.bf16.mxu0 0
      %559 = vmatpush2.bf16.msra.mxu0 0
      %560 = vmatprep.subr.bf16.mxu0 0
      %561 = vmatpush2.bf16.msra.mxu0 0
      %562 = vmatprep.subr.bf16.mxu0 0
      %563 = vmatpush2.bf16.msra.mxu0 0
      %564 = vmatprep.subr.bf16.mxu0 0
      %565 = vmatpush2.bf16.msra.mxu0 0
      %566 = vmatprep.mubr.bf16.mxu0 0
      %567 = vmatmul.mubr.bf16.gmra.mxu0 %v520
      %v568 = vpop.f32.mrf.mxu0
      %v569 = vadd.f32 0.0, %v568
      %v570 = vpop.f32.mrf.mxu0
      %v571 = vpop.f32.mrf.mxu0
      %v572 = vadd.f32 0.0, %v571
      %v573 = vpop.f32.mrf.mxu0
      %574 = vmatprep.mubr.bf16.mxu0 0
      %575 = vmatmul.mubr.bf16.gmra.mxu0 %v523
      %v576 = vpop.f32.mrf.mxu0
      %v577 = vadd.f32 0.0, %v576
      %v578 = vpop.f32.mrf.mxu0
      %v579 = vpop.f32.mrf.mxu0
      %v580 = vadd.f32 0.0, %v579
      %v581 = vpop.f32.mrf.mxu0
      %582 = vmatprep.mubr.bf16.mxu0 0
      %583 = vmatmul.mubr.bf16.gmra.mxu0 %v526
      %v584 = vpop.f32.mrf.mxu0
      %v585 = vadd.f32 0.0, %v584
      %v586 = vpop.f32.mrf.mxu0
      %v587 = vpop.f32.mrf.mxu0
      %v588 = vadd.f32 0.0, %v587
      %v589 = vpop.f32.mrf.mxu0
      %590 = vmatprep.mubr.bf16.mxu0 0
      %591 = vmatmul.mubr.bf16.gmra.mxu0 %v529
      %v592 = vpop.f32.mrf.mxu0
      %v593 = vadd.f32 0.0, %v592
      %v594 = vpop.f32.mrf.mxu0
      %v595 = vpop.f32.mrf.mxu0
      %v596 = vadd.f32 0.0, %v595
      %v597 = vpop.f32.mrf.mxu0
      %598 = vmatprep.mubr.bf16.mxu0 0
      %599 = vmatmul.mubr.bf16.gmra.mxu0 %v532
      %v600 = vpop.f32.mrf.mxu0
      %v601 = vadd.f32 0.0, %v600
      %v602 = vpop.f32.mrf.mxu0
      %v603 = vpop.f32.mrf.mxu0
      %v604 = vpop.f32.mrf.mxu0
      %605 = vdwg.mxu0
      %v606 = vadd.f32 %v399, %v569
      %v607 = vadd.f32 %v402, %v572
      %v608 = vadd.f32 %v407, %v577
      %v609 = vadd.f32 %v410, %v580
      %v610 = vadd.f32 %v415, %v585
      %v611 = vadd.f32 %v418, %v588
      %v612 = vadd.f32 %v423, %v593
      %v613 = vadd.f32 %v426, %v596
      %v614 = vadd.f32 %v431, %v601
      %v615 = vld [vmem:[%s165 + $0x4] sm:$0xe]
      %s616 = scalar_lea.vmem %s1, 24
      %v617 = vld [vmem:[%s616] sm:$0xf]
      %v618 = vld [vmem:[%s616 + $0x4] sm:$0xf]
      %v620 = vunpack.c.l.b16 %v615
      %v621 = vpack.c.b16 %v460, %v620
      %vm622 = vcmask 1046528
      %v623 = vrot.slane %v621, 1
      %v624 = vrot.slane %v470, 1
      %v625 = vsel %vm622, %v623, %v624
      %v626 = vrot.slane %v471, 1
      %v627 = vsel %vm622, %v624, %v626
      %v628 = vrot.slane %v472, 1
      %v629 = vsel %vm622, %v626, %v628
      %v630 = vrot.slane %v473, 1
      %v631 = vsel %vm622, %v628, %v630
      %v634 = vunpack.c.l.b16 %v617
      %v635 = vunpack.c.l.b16 %v618
      %v636 = vpack.c.b16 %v635, %v634
      %v639 = vsel %vm258, %v625, 0
      %v642 = vsel %vm258, %v627, 0
      %v645 = vsel %vm258, %v629, 0
      %v648 = vsel %vm258, %v631, 0
      %v651 = vsel %vm258, %v630, 0
      %653 = vmatprep.subr.bf16.mxu0 0
      %654 = vmatpush1.bf16.msra.mxu0 0
      %655 = vmatprep.subr.bf16.mxu0 0
      %656 = vmatpush1.bf16.msra.mxu0 0
      %657 = vmatprep.subr.bf16.mxu0 0
      %658 = vmatpush1.bf16.msra.mxu0 0
      %659 = vmatprep.subr.bf16.mxu0 0
      %660 = vmatpush1.bf16.msra.mxu0 0
      %661 = vmatprep.subr.bf16.mxu0 0
      %662 = vmatpush1.bf16.msra.mxu0 0
      %663 = vmatprep.subr.bf16.mxu0 0
      %664 = vmatpush1.bf16.msra.mxu0 0
      %665 = vmatprep.subr.bf16.mxu0 0
      %666 = vmatpush1.bf16.msra.mxu0 0
      %667 = vmatprep.subr.bf16.mxu0 0
      %668 = vmatpush1.bf16.msra.mxu0 %v636
      %669 = vmatprep.subr.bf16.mxu0 0
      %670 = vmatpush2.bf16.msra.mxu0 0
      %671 = vmatprep.subr.bf16.mxu0 0
      %672 = vmatpush2.bf16.msra.mxu0 0
      %673 = vmatprep.subr.bf16.mxu0 0
      %674 = vmatpush2.bf16.msra.mxu0 0
      %675 = vmatprep.subr.bf16.mxu0 0
      %676 = vmatpush2.bf16.msra.mxu0 0
      %677 = vmatprep.subr.bf16.mxu0 0
      %678 = vmatpush2.bf16.msra.mxu0 0
      %679 = vmatprep.subr.bf16.mxu0 0
      %680 = vmatpush2.bf16.msra.mxu0 0
      %681 = vmatprep.subr.bf16.mxu0 0
      %682 = vmatpush2.bf16.msra.mxu0 0
      %683 = vmatprep.subr.bf16.mxu0 0
      %684 = vmatpush2.bf16.msra.mxu0 0
      %685 = vmatprep.mubr.bf16.mxu0 0
      %686 = vmatmul.mubr.bf16.gmra.mxu0 %v639
      %v687 = vpop.f32.mrf.mxu0
      %v688 = vadd.f32 0.0, %v687
      %v689 = vpop.f32.mrf.mxu0
      %v690 = vpop.f32.mrf.mxu0
      %v691 = vadd.f32 0.0, %v690
      %v692 = vpop.f32.mrf.mxu0
      %693 = vmatprep.mubr.bf16.mxu0 0
      %694 = vmatmul.mubr.bf16.gmra.mxu0 %v642
      %v695 = vpop.f32.mrf.mxu0
      %v696 = vadd.f32 0.0, %v695
      %v697 = vpop.f32.mrf.mxu0
      %v698 = vpop.f32.mrf.mxu0
      %v699 = vadd.f32 0.0, %v698
      %v700 = vpop.f32.mrf.mxu0
      %701 = vmatprep.mubr.bf16.mxu0 0
      %702 = vmatmul.mubr.bf16.gmra.mxu0 %v645
      %v703 = vpop.f32.mrf.mxu0
      %v704 = vadd.f32 0.0, %v703
      %v705 = vpop.f32.mrf.mxu0
      %v706 = vpop.f32.mrf.mxu0
      %v707 = vadd.f32 0.0, %v706
      %v708 = vpop.f32.mrf.mxu0
      %709 = vmatprep.mubr.bf16.mxu0 0
      %710 = vmatmul.mubr.bf16.gmra.mxu0 %v648
      %v711 = vpop.f32.mrf.mxu0
      %v712 = vadd.f32 0.0, %v711
      %v713 = vpop.f32.mrf.mxu0
      %v714 = vpop.f32.mrf.mxu0
      %v715 = vadd.f32 0.0, %v714
      %v716 = vpop.f32.mrf.mxu0
      %717 = vmatprep.mubr.bf16.mxu0 0
      %718 = vmatmul.mubr.bf16.gmra.mxu0 %v651
      %v719 = vpop.f32.mrf.mxu0
      %v720 = vadd.f32 0.0, %v719
      %v721 = vpop.f32.mrf.mxu0
      %v722 = vpop.f32.mrf.mxu0
      %v723 = vpop.f32.mrf.mxu0
      %724 = vdwg.mxu0
      %v725 = vadd.f32 %v606, %v688
      %v726 = vadd.f32 %v607, %v691
      %v727 = vadd.f32 %v608, %v696
      %v728 = vadd.f32 %v609, %v699
      %v729 = vadd.f32 %v610, %v704
      %v730 = vadd.f32 %v611, %v707
      %v731 = vadd.f32 %v612, %v712
      %v732 = vadd.f32 %v613, %v715
      %v733 = vadd.f32 %v614, %v720
      %v734 = vld [vmem:[%s2] sm:$0x1]
      %v736 = vlaneseq
      %v737 = vshrl.u32 %v736, 7
      %v738 = vsub.s32 0, %v737
      %v739 = vrot.slane %v734, %v738
      %v741 = vadd.f32 %v725, %v739
      %v742 = vadd.f32 %v726, %v739
      %v743 = vadd.f32 %v727, %v739
      %v744 = vadd.f32 %v728, %v739
      %v745 = vadd.f32 %v729, %v739
      %v746 = vadd.f32 %v730, %v739
      %v747 = vadd.f32 %v731, %v739
      %v748 = vadd.f32 %v732, %v739
      %v749 = vadd.f32 %v733, %v739
      %v750 = vmax.f32 %v741, 0.0
      %v751 = vmax.f32 %v742, 0.0
      %v752 = vmax.f32 %v743, 0.0
      %v753 = vmax.f32 %v744, 0.0
      %v754 = vmax.f32 %v745, 0.0
      %v755 = vmax.f32 %v746, 0.0
      %v756 = vmax.f32 %v747, 0.0
      %v757 = vmax.f32 %v748, 0.0
      %v758 = vmax.f32 %v749, 0.0
      %v759 = vpack.c.bf16 %v751, %v750
      %v760 = vpack.c.bf16 %v753, %v752
      %v761 = vpack.c.bf16 %v755, %v754
      %v762 = vpack.c.bf16 %v757, %v756
      %v763 = vpack.c.bf16 %v758, %v758
      %v769 = vunpack.c.l.b16 %v759
      %v770 = vunpack.c.h.b16 %v759
      %v771 = vunpack.c.l.b16 %v760
      %v772 = vunpack.c.h.b16 %v760
      %v773 = vunpack.c.l.b16 %v761
      %v774 = vunpack.c.h.b16 %v761
      %v775 = vunpack.c.l.b16 %v762
      %v776 = vunpack.c.h.b16 %v762
      %v777 = vunpack.c.l.b16 %v763
      %v778 = vpack.c.b16 %v769, %v769
      %v779 = vpack.c.b16 %v770, %v770
      %v780 = vpack.c.b16 %v771, %v771
      %v781 = vpack.c.b16 %v772, %v772
      %v782 = vpack.c.b16 %v773, %v773
      %v783 = vpack.c.b16 %v774, %v774
      %v784 = vpack.c.b16 %v775, %v775
      %v785 = vpack.c.b16 %v776, %v776
      %v786 = vpack.c.b16 %v777, %v777
      %vm796 = vcmask 27648
      %797 = vst.msk [vmem:[%s170] sm:$0xf] %vm796, %v778
      %798 = vst.msk [vmem:[%s170 + $0x4] sm:$0xf] %vm796, %v779
      %799 = vst.msk [vmem:[%s170 + $0x8] sm:$0xf] %vm796, %v780
      %800 = vst.msk [vmem:[%s170 + $0xc] sm:$0xf] %vm796, %v781
      %801 = vst.msk [vmem:[%s170 + $0x10] sm:$0xf] %vm796, %v782
      %802 = vst.msk [vmem:[%s170 + $0x14] sm:$0xf] %vm796, %v783
      %803 = vst.msk [vmem:[%s170 + $0x18] sm:$0xf] %vm796, %v784
      %804 = vst.msk [vmem:[%s170 + $0x1c] sm:$0xf] %vm796, %v785
      %805 = vst.msk [vmem:[%s170 + $0x20] sm:$0xf] %vm796, %v786
      %p806 = scmp.lt.s32.totalorder %s14, 1
      %s807 = scalar_select %p806, %s14, 1
      %s808 = smul.addr %s807, 9
      %s809 = smul.addr %s808, 4
      %s810 = scalar_lea.vmem %s3, %s809
      // Predicated region
      $region33: #{early_cnn_forward.3} parent=31 // pred_check
        %p811 = pneg %p100
      $region34: #{early_cnn_forward.3} parent=31 // pred_check_branch
        %813 = sbr.rel (%p811) target = $region36
      $region35: #{early_cnn_forward.3} parent=31 // pred_region
        _
      $region36: #{early_cnn_forward.3} parent=31 // pred_fallthru
        _
    $region32: #{early_cnn_forward.3} parent=5 // pred_fallthru
      _
    %p814 = scmp.le.s32.totalorder 2, %s9
    // Predicated region
    $region37: #{early_cnn_forward.3} parent=5 // pred_check
      %p815 = pneg %p814
    $region38: #{early_cnn_forward.3} parent=5 // pred_check_branch
      %817 = sbr.rel (%p815) target = $region40
    $region39: #{early_cnn_forward.3} parent=5 // pred_region
      %s818 = ssub.s32 %s9, 2
      // Predicated region
      $region41: #{early_cnn_forward.3} parent=39 // pred_check
        %p819 = pneg %p106
      $region42: #{early_cnn_forward.3} parent=39 // pred_check_branch
        %821 = sbr.rel (%p819) target = $region44
      $region43: #{early_cnn_forward.3} parent=39 // pred_region
        %p822 = scmp.lt.s32.totalorder %s15, 1
        %s823 = scalar_select %p822, %s15, 1
        %s824 = smul.addr %s823, 9
        %s825 = smul.addr %s824, 4
        %s826 = scalar_lea.vmem %s3, %s825
      $region44: #{early_cnn_forward.3} parent=39 // pred_fallthru
        _
    $region40: #{early_cnn_forward.3} parent=5 // pred_fallthru
      _
  $region6: #{early_cnn_forward.3} parent=0 // loop_footer
    %s13 = sadd.s32 1, %s9
  $region7: #{early_cnn_forward.3} parent=0 // loop_footer_branch
    %8 = sbr.rel target = $region3
  $region8: #{early_cnn_forward.3} parent=0 // loop_exit
    _

// kernel: early_cnn_forward.4
$region0: #{early_cnn_forward.4}
  #allocation0 [shape = 'u32[]', space=smem, size = 0x4, offset = 0x4, fixed_abs, tag = 'smem constant byte address 0x4 - core index']
  #allocation1 [shape = 'u32[144,128]{1,0:T(1,128)}', space=vmem, size = 0x12000, scoped, tag = 'internal scratch']
  %s0 = inlined_call_operand.vmem [shape: bf16[2,26,16], index: 0, kind: input, shape index: {}]
  %s1 = inlined_call_operand.vmem [shape: bf16[4,16,8], index: 1, kind: input, shape index: {}]
  %s2 = inlined_call_operand.vmem [shape: f32[1,8], index: 2, kind: input, shape index: {}]
  %s3 = inlined_call_operand.vmem [shape: bf16[2,20,8], index: 3, kind: output, shape index: {}]
  %s4 = sld [smem:[#allocation0]]
  $region45: #{early_cnn_forward.4} parent=0
    _
  %s6 = ssub.s32 1, %s4
  %s7 = scalar_select 0, %s6, %s4
  loop: start=0, step=1, limit=4
  $region2: #{early_cnn_forward.4} parent=0 // loop_pre_header
    _
  $region3: #{early_cnn_forward.4} parent=0 // loop_header
    %s9 = sphi 0, %s13
    %p10 = scmp.ge.s32.totalorder %s9, 4
    %s19 = sphi 0, %s21
    %s22 = sphi 0, %s19
    %s23 = sphi 0, %s22
    %s39 = sphi 0, %s23
    %s43 = sphi 0, %s43
    %s45 = sphi 0, %s43
    %s46 = sphi 0, %s45
    %s60 = sphi 0, %s46
    %s64 = sphi 0, %s64
    %s66 = sphi 0, %s64
    %s67 = sphi 0, %s66
    %s81 = sphi 0, %s67
    %s87 = sphi 0, %s89
    %s90 = sphi 0, %s87
    %s91 = sphi 0, %s90
    %s107 = sphi 0, %s91
  $region4: #{early_cnn_forward.4} parent=0 // loop_header_branch
    %12 = sbr.rel (%p10) target = $region8
  $region5: #{early_cnn_forward.4} parent=0 // loop_body
    %s14 = ssub.s32 %s9, 1
    %s15 = ssub.s32 %s9, 2
    %s16 = sadd.s32 %s9, 1
    %s17 = ssub.s32 %s9, %s16
    %p18 = scmp.eq.s32.totalorder %s17, 0
    %s20 = sadd.s32 %s19, 1
    %s21 = scalar_select %p18, %s19, %s20
    %p24 = pneg %p18
    %p25 = scmp.eq.s32.totalorder %s9, 1
    %p26 = por %p24, %p25
    %p27 = scmp.ne.s32.totalorder %s19, %s22
    %p28 = scmp.eq.s32.totalorder %s9, 0
    %p29 = por %p27, %p28
    %p30 = scmp.ne.s32.totalorder %s19, %s22
    %p31 = scmp.eq.s32.totalorder %s14, 1
    %p32 = por %p30, %p31
    %p33 = scmp.ne.s32.totalorder %s22, %s23
    %p34 = scmp.eq.s32.totalorder %s14, 0
    %p35 = por %p33, %p34
    %p36 = scmp.ne.s32.totalorder %s22, %s23
    %p37 = scmp.eq.s32.totalorder %s15, 1
    %p38 = por %p36, %p37
    %p40 = scmp.ne.s32.totalorder %s23, %s39
    %p41 = scmp.eq.s32.totalorder %s15, 0
    %p42 = por %p40, %p41
    %s44 = sadd.s32 %s43, 1
    %p47 = scmp.eq.s32.totalorder %s9, 1
    %p48 = scmp.ne.s32.totalorder %s43, %s45
    %p49 = scmp.eq.s32.totalorder %s9, 0
    %p50 = por %p48, %p49
    %p51 = scmp.ne.s32.totalorder %s43, %s45
    %p52 = scmp.eq.s32.totalorder %s14, 1
    %p53 = por %p51, %p52
    %p54 = scmp.ne.s32.totalorder %s45, %s46
    %p55 = scmp.eq.s32.totalorder %s14, 0
    %p56 = por %p54, %p55
    %p57 = scmp.ne.s32.totalorder %s45, %s46
    %p58 = scmp.eq.s32.totalorder %s15, 1
    %p59 = por %p57, %p58
    %p61 = scmp.ne.s32.totalorder %s46, %s60
    %p62 = scmp.eq.s32.totalorder %s15, 0
    %p63 = por %p61, %p62
    %s65 = sadd.s32 %s64, 1
    %p68 = scmp.eq.s32.totalorder %s9, 1
    %p69 = scmp.ne.s32.totalorder %s64, %s66
    %p70 = scmp.eq.s32.totalorder %s9, 0
    %p71 = por %p69, %p70
    %p72 = scmp.ne.s32.totalorder %s64, %s66
    %p73 = scmp.eq.s32.totalorder %s14, 1
    %p74 = por %p72, %p73
    %p75 = scmp.ne.s32.totalorder %s66, %s67
    %p76 = scmp.eq.s32.totalorder %s14, 0
    %p77 = por %p75, %p76
    %p78 = scmp.ne.s32.totalorder %s66, %s67
    %p79 = scmp.eq.s32.totalorder %s15, 1
    %p80 = por %p78, %p79
    %p82 = scmp.ne.s32.totalorder %s67, %s81
    %p83 = scmp.eq.s32.totalorder %s15, 0
    %p84 = por %p82, %p83
    %s85 = ssub.s32 %s9, %s16
    %p86 = scmp.eq.s32.totalorder %s85, 0
    %s88 = sadd.s32 %s87, 1
    %s89 = scalar_select %p86, %s87, %s88
    %p92 = pneg %p86
    %p93 = scmp.eq.s32.totalorder %s9, 1
    %p94 = por %p92, %p93
    %p95 = scmp.ne.s32.totalorder %s87, %s90
    %p96 = scmp.eq.s32.totalorder %s9, 0
    %p97 = por %p95, %p96
    %p98 = scmp.ne.s32.totalorder %s87, %s90
    %p99 = scmp.eq.s32.totalorder %s14, 1
    %p100 = por %p98, %p99
    %p101 = scmp.ne.s32.totalorder %s90, %s91
    %p102 = scmp.eq.s32.totalorder %s14, 0
    %p103 = por %p101, %p102
    %p104 = scmp.ne.s32.totalorder %s90, %s91
    %p105 = scmp.eq.s32.totalorder %s15, 1
    %p106 = por %p104, %p105
    %p108 = scmp.ne.s32.totalorder %s91, %s107
    %p109 = scmp.eq.s32.totalorder %s15, 0
    %p110 = por %p108, %p109
    %p111 = scmp.le.s32.totalorder 1, %s9
    %p112 = scmp.lt.s32.totalorder %s9, 3
    %p113 = pnand %p111, %p112
    %p114 = pneg %p113
    // Predicated region
    $region9: #{early_cnn_forward.4} parent=5 // pred_check
      _
    $region10: #{early_cnn_forward.4} parent=5 // pred_check_branch
      %116 = sbr.rel (%p113) target = $region12
    $region11: #{early_cnn_forward.4} parent=5 // pred_region
      %s117 = ssub.s32 %s9, 1
      // Predicated region
      $region13: #{early_cnn_forward.4} parent=11 // pred_check
        %p118 = pneg %p56
      $region14: #{early_cnn_forward.4} parent=11 // pred_check_branch
        %120 = sbr.rel (%p118) target = $region16
      $region15: #{early_cnn_forward.4} parent=11 // pred_region
        _
      $region16: #{early_cnn_forward.4} parent=11 // pred_fallthru
        _
      // Predicated region
      $region17: #{early_cnn_forward.4} parent=11 // pred_check
        %p121 = pneg %p77
      $region18: #{early_cnn_forward.4} parent=11 // pred_check_branch
        %123 = sbr.rel (%p121) target = $region20
      $region19: #{early_cnn_forward.4} parent=11 // pred_region
        _
      $region20: #{early_cnn_forward.4} parent=11 // pred_fallthru
        _
    $region12: #{early_cnn_forward.4} parent=5 // pred_fallthru
      _
    %p124 = scmp.lt.s32.totalorder %s9, 2
    // Predicated region
    $region21: #{early_cnn_forward.4} parent=5 // pred_check
      %p125 = pneg %p124
    $region22: #{early_cnn_forward.4} parent=5 // pred_check_branch
      %127 = sbr.rel (%p125) target = $region24
    $region23: #{early_cnn_forward.4} parent=5 // pred_region
      // Predicated region
      $region25: #{early_cnn_forward.4} parent=23 // pred_check
        %p128 = pneg %p29
      $region26: #{early_cnn_forward.4} parent=23 // pred_check_branch
        %130 = sbr.rel (%p128) target = $region28
      $region27: #{early_cnn_forward.4} parent=23 // pred_region
        %p131 = scmp.lt.s32.totalorder %s9, 1
        %s132 = scalar_select %p131, %s9, 1
        %s133 = smul.addr %s132, 4
        %s134 = smul.addr %s133, 4
        %s135 = scalar_lea.vmem %s0, %s134
      $region28: #{early_cnn_forward.4} parent=23 // pred_fallthru
        _
    $region24: #{early_cnn_forward.4} parent=5 // pred_fallthru
      _
    %p136 = scmp.le.s32.totalorder 1, %s9
    %p137 = scmp.lt.s32.totalorder %s9, 3
    %p138 = pnand %p136, %p137
    %p139 = pneg %p138
    // Predicated region
    $region29: #{early_cnn_forward.4} parent=5 // pred_check
      _
    $region30: #{early_cnn_forward.4} parent=5 // pred_check_branch
      %141 = sbr.rel (%p138) target = $region32
    $region31: #{early_cnn_forward.4} parent=5 // pred_region
      %s142 = ssub.s32 %s9, 1
      %p143 = scmp.lt.s32.totalorder %s14, 1
      %s144 = scalar_select %p143, %s14, 1
      %s145 = smul.addr %s144, 4
      %s146 = smul.addr %s145, 4
      %s147 = scalar_lea.vmem %s0, %s146
      %p148 = pneg %p35
      %p149 = pneg %p32
      %p150 = pneg %p56
      %p151 = pneg %p53
      %p152 = pneg %p77
      %p153 = pneg %p74
      %p154 = pneg %p103
      %p155 = pneg %p100
      %p156 = scmp.lt.s32.totalorder %s14, 1
      %s157 = scalar_select %p156, %s14, 1
      %s158 = smul.addr %s157, 3
      %s159 = smul.addr %s158, 4
      %s160 = scalar_lea.vmem %s3, %s159
      %p161 = scmp.lt.s32.totalorder %s14, 1
      %s162 = scalar_select %p161, %s14, 1
      %s163 = smul.addr %s162, 4
      %s164 = smul.addr %s163, 4
      %s165 = scalar_lea.vmem %s0, %s164
      %p166 = scmp.lt.s32.totalorder %s14, 1
      %s167 = scalar_select %p166, %s14, 1
      %s168 = smul.addr %s167, 3
      %s169 = smul.addr %s168, 4
      %s170 = scalar_lea.vmem %s3, %s169
      %v172 = vld [vmem:[%s165] sm:$0xf]
      %v173 = vld [vmem:[%s165 + $0x4] sm:$0xf]
      %v174 = vld [vmem:[%s165 + $0x8] sm:$0x3]
      %v175 = vld [vmem:[%s1] sm:$0xf]
      %v176 = vld [vmem:[%s1 + $0x4] sm:$0xf]
      %v177 = vld [vmem:[%s165 + $0x8] sm:$0x7]
      %s178 = scalar_lea.vmem %s1, 8
      %v179 = vld [vmem:[%s178] sm:$0xf]
      %v180 = vld [vmem:[%s178 + $0x4] sm:$0xf]
      %v184 = vunpack.c.l.b16 %v172
      %v185 = vunpack.c.l.b16 %v173
      %v186 = vunpack.c.l.b16 %v177
      %v187 = vpack.c.b16 %v185, %v184
      %v188 = vpack.c.b16 %v186, %v186
      %vm189 = vsmask.f32 7424
      %v191 = vshrl.u32 %v187, 16
      %v193 = vshll.u32 %v187, 16
      %v195 = vrot.slane %v193, 1
      %v196 = vor.u32 %v191, %v195
      %v198 = vshll.u32 %v188, 16
      %v200 = vrot.slane %v198, 1
      %v201 = vsel %vm189, %v196, %v200
      %v202 = vshrl.u32 %v188, 16
      %v204 = vor.u32 %v202, %v200
      %v207 = vunpack.c.l.b16 %v179
      %v208 = vunpack.c.l.b16 %v180
      %v209 = vpack.c.b16 %v208, %v207
      %vm211 = vcmask 130048
      %v213 = vsel %vm211, %v201, 0
      %v216 = vsel %vm211, %v204, 0
      %218 = vmatprep.subr.bf16.mxu0 0
      %219 = vmatpush1.bf16.msra.mxu0 0
      %220 = vmatprep.subr.bf16.mxu0 0
      %221 = vmatpush1.bf16.msra.mxu0 0
      %222 = vmatprep.subr.bf16.mxu0 0
      %223 = vmatpush1.bf16.msra.mxu0 0
      %224 = vmatprep.subr.bf16.mxu0 0
      %225 = vmatpush1.bf16.msra.mxu0 0
      %226 = vmatprep.subr.bf16.mxu0 0
      %227 = vmatpush1.bf16.msra.mxu0 0
      %228 = vmatprep.subr.bf16.mxu0 0
      %229 = vmatpush1.bf16.msra.mxu0 0
      %230 = vmatprep.subr.bf16.mxu0 0
      %231 = vmatpush1.bf16.msra.mxu0 0
      %232 = vmatprep.subr.bf16.mxu0 0
      %233 = vmatpush1.bf16.msra.mxu0 %v209
      %234 = vmatprep.subr.bf16.mxu0 0
      %235 = vmatpush2.bf16.msra.mxu0 0
      %236 = vmatprep.subr.bf16.mxu0 0
      %237 = vmatpush2.bf16.msra.mxu0 0
      %238 = vmatprep.subr.bf16.mxu0 0
      %239 = vmatpush2.bf16.msra.mxu0 0
      %240 = vmatprep.subr.bf16.mxu0 0
      %241 = vmatpush2.bf16.msra.mxu0 0
      %242 = vmatprep.subr.bf16.mxu0 0
      %243 = vmatpush2.bf16.msra.mxu0 0
      %244 = vmatprep.subr.bf16.mxu0 0
      %245 = vmatpush2.bf16.msra.mxu0 0
      %246 = vmatprep.subr.bf16.mxu0 0
      %247 = vmatpush2.bf16.msra.mxu0 0
      %248 = vmatprep.subr.bf16.mxu0 0
      %249 = vmatpush2.bf16.msra.mxu0 0
      %250 = vmatprep.mubr.bf16.mxu0 0
      %251 = vmatmul.mubr.bf16.gmra.mxu0 %v213
      %v252 = vpop.f32.mrf.mxu0
      %v253 = vadd.f32 0.0, %v252
      %v254 = vpop.f32.mrf.mxu0
      %v255 = vpop.f32.mrf.mxu0
      %v256 = vadd.f32 0.0, %v255
      %v257 = vpop.f32.mrf.mxu0
      %258 = vmatprep.mubr.bf16.mxu0 0
      %259 = vmatmul.mubr.bf16.gmra.mxu0 %v216
      %v260 = vpop.f32.mrf.mxu0
      %v261 = vadd.f32 0.0, %v260
      %v262 = vpop.f32.mrf.mxu0
      %v263 = vpop.f32.mrf.mxu0
      %v264 = vpop.f32.mrf.mxu0
      %265 = vdwg.mxu0
      %v267 = vunpack.c.l.b16 %v174
      %v268 = vpack.c.b16 %v267, %v267
      %v271 = vunpack.c.l.b16 %v175
      %v272 = vunpack.c.l.b16 %v176
      %v273 = vpack.c.b16 %v272, %v271
      %v275 = vsel %vm211, %v187, 0
      %v278 = vsel %vm211, %v268, 0
      %280 = vmatprep.subr.bf16.mxu0 0
      %281 = vmatpush1.bf16.msra.mxu0 0
      %282 = vmatprep.subr.bf16.mxu0 0
      %283 = vmatpush1.bf16.msra.mxu0 0
      %284 = vmatprep.subr.bf16.mxu0 0
      %285 = vmatpush1.bf16.msra.mxu0 0
      %286 = vmatprep.subr.bf16.mxu0 0
      %287 = vmatpush1.bf16.msra.mxu0 0
      %288 = vmatprep.subr.bf16.mxu0 0
      %289 = vmatpush1.bf16.msra.mxu0 0
      %290 = vmatprep.subr.bf16.mxu0 0
      %291 = vmatpush1.bf16.msra.mxu0 0
      %292 = vmatprep.subr.bf16.mxu0 0
      %293 = vmatpush1.bf16.msra.mxu0 0
      %294 = vmatprep.subr.bf16.mxu0 0
      %295 = vmatpush1.bf16.msra.mxu0 %v273
      %296 = vmatprep.subr.bf16.mxu0 0
      %297 = vmatpush2.bf16.msra.mxu0 0
      %298 = vmatprep.subr.bf16.mxu0 0
      %299 = vmatpush2.bf16.msra.mxu0 0
      %300 = vmatprep.subr.bf16.mxu0 0
      %301 = vmatpush2.bf16.msra.mxu0 0
      %302 = vmatprep.subr.bf16.mxu0 0
      %303 = vmatpush2.bf16.msra.mxu0 0
      %304 = vmatprep.subr.bf16.mxu0 0
      %305 = vmatpush2.bf16.msra.mxu0 0
      %306 = vmatprep.subr.bf16.mxu0 0
      %307 = vmatpush2.bf16.msra.mxu0 0
      %308 = vmatprep.subr.bf16.mxu0 0
      %309 = vmatpush2.bf16.msra.mxu0 0
      %310 = vmatprep.subr.bf16.mxu0 0
      %311 = vmatpush2.bf16.msra.mxu0 0
      %312 = vmatprep.mubr.bf16.mxu0 0
      %313 = vmatmul.mubr.bf16.gmra.mxu0 %v275
      %v314 = vpop.f32.mrf.mxu0
      %v315 = vadd.f32 %v253, %v314
      %v316 = vpop.f32.mrf.mxu0
      %v317 = vpop.f32.mrf.mxu0
      %v318 = vadd.f32 %v256, %v317
      %v319 = vpop.f32.mrf.mxu0
      %320 = vmatprep.mubr.bf16.mxu0 0
      %321 = vmatmul.mubr.bf16.gmra.mxu0 %v278
      %v322 = vpop.f32.mrf.mxu0
      %v323 = vadd.f32 %v261, %v322
      %v324 = vpop.f32.mrf.mxu0
      %v325 = vpop.f32.mrf.mxu0
      %v326 = vpop.f32.mrf.mxu0
      %327 = vdwg.mxu0
      %v328 = vld [vmem:[%s165] sm:$0xc]
      %v329 = vld [vmem:[%s165 + $0x4] sm:$0xf]
      %v330 = vld [vmem:[%s165 + $0x8] sm:$0xf]
      %v331 = vld [vmem:[%s165 + $0xc] sm:$0x1]
      %s332 = scalar_lea.vmem %s1, 16
      %v333 = vld [vmem:[%s332] sm:$0xf]
      %v334 = vld [vmem:[%s332 + $0x4] sm:$0xf]
      %v339 = vunpack.c.l.b16 %v328
      %v340 = vunpack.c.l.b16 %v329
      %v341 = vunpack.c.l.b16 %v330
      %v342 = vunpack.c.l.b16 %v331
      %v343 = vpack.c.b16 %v340, %v339
      %v344 = vpack.c.b16 %v342, %v341
      %vm345 = vsmask.f32 5376
      %v347 = vshrl.u32 %v343, 16
      %v349 = vrot.slane %v347, 2
      %v350 = vshll.u32 %v343, 16
      %v352 = vrot.slane %v350, 3
      %v353 = vor.u32 %v349, %v352
      %v355 = vshrl.u32 %v344, 16
      %v357 = vrot.slane %v355, 2
      %v358 = vshll.u32 %v344, 16
      %v360 = vrot.slane %v358, 3
      %v361 = vor.u32 %v357, %v360
      %v362 = vsel %vm345, %v353, %v361
      %v365 = vunpack.c.l.b16 %v333
      %v366 = vunpack.c.l.b16 %v334
      %v367 = vpack.c.b16 %v366, %v365
      %v370 = vsel %vm211, %v362, 0
      %v373 = vsel %vm211, %v361, 0
      %375 = vmatprep.subr.bf16.mxu0 0
      %376 = vmatpush1.bf16.msra.mxu0 0
      %377 = vmatprep.subr.bf16.mxu0 0
      %378 = vmatpush1.bf16.msra.mxu0 0
      %379 = vmatprep.subr.bf16.mxu0 0
      %380 = vmatpush1.bf16.msra.mxu0 0
      %381 = vmatprep.subr.bf16.mxu0 0
      %382 = vmatpush1.bf16.msra.mxu0 0
      %383 = vmatprep.subr.bf16.mxu0 0
      %384 = vmatpush1.bf16.msra.mxu0 0
      %385 = vmatprep.subr.bf16.mxu0 0
      %386 = vmatpush1.bf16.msra.mxu0 0
      %387 = vmatprep.subr.bf16.mxu0 0
      %388 = vmatpush1.bf16.msra.mxu0 0
      %389 = vmatprep.subr.bf16.mxu0 0
      %390 = vmatpush1.bf16.msra.mxu0 %v367
      %391 = vmatprep.subr.bf16.mxu0 0
      %392 = vmatpush2.bf16.msra.mxu0 0
      %393 = vmatprep.subr.bf16.mxu0 0
      %394 = vmatpush2.bf16.msra.mxu0 0
      %395 = vmatprep.subr.bf16.mxu0 0
      %396 = vmatpush2.bf16.msra.mxu0 0
      %397 = vmatprep.subr.bf16.mxu0 0
      %398 = vmatpush2.bf16.msra.mxu0 0
      %399 = vmatprep.subr.bf16.mxu0 0
      %400 = vmatpush2.bf16.msra.mxu0 0
      %401 = vmatprep.subr.bf16.mxu0 0
      %402 = vmatpush2.bf16.msra.mxu0 0
      %403 = vmatprep.subr.bf16.mxu0 0
      %404 = vmatpush2.bf16.msra.mxu0 0
      %405 = vmatprep.subr.bf16.mxu0 0
      %406 = vmatpush2.bf16.msra.mxu0 0
      %407 = vmatprep.mubr.bf16.mxu0 0
      %408 = vmatmul.mubr.bf16.gmra.mxu0 %v370
      %v409 = vpop.f32.mrf.mxu0
      %v410 = vadd.f32 0.0, %v409
      %v411 = vpop.f32.mrf.mxu0
      %v412 = vpop.f32.mrf.mxu0
      %v413 = vadd.f32 0.0, %v412
      %v414 = vpop.f32.mrf.mxu0
      %415 = vmatprep.mubr.bf16.mxu0 0
      %416 = vmatmul.mubr.bf16.gmra.mxu0 %v373
      %v417 = vpop.f32.mrf.mxu0
      %v418 = vadd.f32 0.0, %v417
      %v419 = vpop.f32.mrf.mxu0
      %v420 = vpop.f32.mrf.mxu0
      %v421 = vpop.f32.mrf.mxu0
      %422 = vdwg.mxu0
      %v423 = vadd.f32 %v315, %v410
      %v424 = vadd.f32 %v318, %v413
      %v425 = vadd.f32 %v323, %v418
      %v426 = vld [vmem:[%s165] sm:$0x8]
      %s427 = scalar_lea.vmem %s1, 24
      %v428 = vld [vmem:[%s427] sm:$0xf]
      %v429 = vld [vmem:[%s427 + $0x4] sm:$0xf]
      %v431 = vunpack.c.l.b16 %v426
      %v432 = vpack.c.b16 %v340, %v431
      %vm433 = vcmask 1044480
      %v434 = vrot.slane %v432, 3
      %v435 = vrot.slane %v344, 3
      %v436 = vsel %vm433, %v434, %v435
      %v439 = vunpack.c.l.b16 %v428
      %v440 = vunpack.c.l.b16 %v429
      %v441 = vpack.c.b16 %v440, %v439
      %v444 = vsel %vm211, %v436, 0
      %v447 = vsel %vm211, %v435, 0
      %449 = vmatprep.subr.bf16.mxu0 0
      %450 = vmatpush1.bf16.msra.mxu0 0
      %451 = vmatprep.subr.bf16.mxu0 0
      %452 = vmatpush1.bf16.msra.mxu0 0
      %453 = vmatprep.subr.bf16.mxu0 0
      %454 = vmatpush1.bf16.msra.mxu0 0
      %455 = vmatprep.subr.bf16.mxu0 0
      %456 = vmatpush1.bf16.msra.mxu0 0
      %457 = vmatprep.subr.bf16.mxu0 0
      %458 = vmatpush1.bf16.msra.mxu0 0
      %459 = vmatprep.subr.bf16.mxu0 0
      %460 = vmatpush1.bf16.msra.mxu0 0
      %461 = vmatprep.subr.bf16.mxu0 0
      %462 = vmatpush1.bf16.msra.mxu0 0
      %463 = vmatprep.subr.bf16.mxu0 0
      %464 = vmatpush1.bf16.msra.mxu0 %v441
      %465 = vmatprep.subr.bf16.mxu0 0
      %466 = vmatpush2.bf16.msra.mxu0 0
      %467 = vmatprep.subr.bf16.mxu0 0
      %468 = vmatpush2.bf16.msra.mxu0 0
      %469 = vmatprep.subr.bf16.mxu0 0
      %470 = vmatpush2.bf16.msra.mxu0 0
      %471 = vmatprep.subr.bf16.mxu0 0
      %472 = vmatpush2.bf16.msra.mxu0 0
      %473 = vmatprep.subr.bf16.mxu0 0
      %474 = vmatpush2.bf16.msra.mxu0 0
      %475 = vmatprep.subr.bf16.mxu0 0
      %476 = vmatpush2.bf16.msra.mxu0 0
      %477 = vmatprep.subr.bf16.mxu0 0
      %478 = vmatpush2.bf16.msra.mxu0 0
      %479 = vmatprep.subr.bf16.mxu0 0
      %480 = vmatpush2.bf16.msra.mxu0 0
      %481 = vmatprep.mubr.bf16.mxu0 0
      %482 = vmatmul.mubr.bf16.gmra.mxu0 %v444
      %v483 = vpop.f32.mrf.mxu0
      %v484 = vadd.f32 0.0, %v483
      %v485 = vpop.f32.mrf.mxu0
      %v486 = vpop.f32.mrf.mxu0
      %v487 = vadd.f32 0.0, %v486
      %v488 = vpop.f32.mrf.mxu0
      %489 = vmatprep.mubr.bf16.mxu0 0
      %490 = vmatmul.mubr.bf16.gmra.mxu0 %v447
      %v491 = vpop.f32.mrf.mxu0
      %v492 = vadd.f32 0.0, %v491
      %v493 = vpop.f32.mrf.mxu0
      %v494 = vpop.f32.mrf.mxu0
      %v495 = vpop.f32.mrf.mxu0
      %496 = vdwg.mxu0
      %v497 = vadd.f32 %v423, %v484
      %v498 = vadd.f32 %v424, %v487
      %v499 = vadd.f32 %v425, %v492
      %v500 = vld [vmem:[%s2] sm:$0x1]
      %v502 = vlaneseq
      %v503 = vshrl.u32 %v502, 7
      %v504 = vsub.s32 0, %v503
      %v505 = vrot.slane %v500, %v504
      %v507 = vadd.f32 %v497, %v505
      %v508 = vadd.f32 %v498, %v505
      %v509 = vadd.f32 %v499, %v505
      %v510 = vmax.f32 %v507, 0.0
      %v511 = vmax.f32 %v508, 0.0
      %v512 = vmax.f32 %v509, 0.0
      %v513 = vpack.c.bf16 %v511, %v510
      %v514 = vpack.c.bf16 %v512, %v512
      %v517 = vunpack.c.l.b16 %v513
      %v518 = vunpack.c.h.b16 %v513
      %v519 = vunpack.c.l.b16 %v514
      %v520 = vpack.c.b16 %v517, %v517
      %v521 = vpack.c.b16 %v518, %v518
      %v522 = vpack.c.b16 %v519, %v519
      %vm526 = vcmask 60416
      %527 = vst.msk [vmem:[%s170] sm:$0xf] %vm526, %v520
      %528 = vst.msk [vmem:[%s170 + $0x4] sm:$0xf] %vm526, %v521
      %vm529 = vcmask 58368
      %530 = vst.msk [vmem:[%s170 + $0x8] sm:$0x3] %vm529, %v522
      %p531 = scmp.lt.s32.totalorder %s14, 1
      %s532 = scalar_select %p531, %s14, 1
      %s533 = smul.addr %s532, 3
      %s534 = smul.addr %s533, 4
      %s535 = scalar_lea.vmem %s3, %s534
      // Predicated region
      $region33: #{early_cnn_forward.4} parent=31 // pred_check
        %p536 = pneg %p100
      $region34: #{early_cnn_forward.4} parent=31 // pred_check_branch
        %538 = sbr.rel (%p536) target = $region36
      $region35: #{early_cnn_forward.4} parent=31 // pred_region
        _
      $region36: #{early_cnn_forward.4} parent=31 // pred_fallthru
        _
    $region32: #{early_cnn_forward.4} parent=5 // pred_fallthru
      _
    %p539 = scmp.le.s32.totalorder 2, %s9
    // Predicated region
    $region37: #{early_cnn_forward.4} parent=5 // pred_check
      %p540 = pneg %p539
    $region38: #{early_cnn_forward.4} parent=5 // pred_check_branch
      %542 = sbr.rel (%p540) target = $region40
    $region39: #{early_cnn_forward.4} parent=5 // pred_region
      %s543 = ssub.s32 %s9, 2
      // Predicated region
      $region41: #{early_cnn_forward.4} parent=39 // pred_check
        %p544 = pneg %p106
      $region42: #{early_cnn_forward.4} parent=39 // pred_check_branch
        %546 = sbr.rel (%p544) target = $region44
      $region43: #{early_cnn_forward.4} parent=39 // pred_region
        %p547 = scmp.lt.s32.totalorder %s15, 1
        %s548 = scalar_select %p547, %s15, 1
        %s549 = smul.addr %s548, 3
        %s550 = smul.addr %s549, 4
        %s551 = scalar_lea.vmem %s3, %s550
      $region44: #{early_cnn_forward.4} parent=39 // pred_fallthru
        _
    $region40: #{early_cnn_forward.4} parent=5 // pred_fallthru
      _
  $region6: #{early_cnn_forward.4} parent=0 // loop_footer
    %s13 = sadd.s32 1, %s9
  $region7: #{early_cnn_forward.4} parent=0 // loop_footer_branch
    %8 = sbr.rel target = $region3
  $region8: #{early_cnn_forward.4} parent=0 // loop_exit
    _

// kernel: early_cnn_forward.5
$region0: #{early_cnn_forward.5}
  #allocation0 [shape = 'u32[]', space=smem, size = 0x4, offset = 0x4, fixed_abs, tag = 'smem constant byte address 0x4 - core index']
  #allocation1 [shape = 'u32[144,128]{1,0:T(1,128)}', space=vmem, size = 0x12000, scoped, tag = 'internal scratch']
  %s0 = inlined_call_operand.vmem [shape: bf16[2,10,32], index: 0, kind: input, shape index: {}]
  %s1 = inlined_call_operand.vmem [shape: bf16[4,32,16], index: 1, kind: input, shape index: {}]
  %s2 = inlined_call_operand.vmem [shape: f32[1,16], index: 2, kind: input, shape index: {}]
  %s3 = inlined_call_operand.vmem [shape: bf16[16,32], index: 3, kind: input, shape index: {}]
  %s4 = inlined_call_operand.vmem [shape: f32[1,32], index: 4, kind: input, shape index: {}]
  %s5 = inlined_call_operand.vmem [shape: bf16[2,6,32], index: 5, kind: output, shape index: {}]
  %s6 = sld [smem:[#allocation0]]
  $region53: #{early_cnn_forward.5} parent=0
    _
  %s8 = ssub.s32 1, %s6
  %s9 = scalar_select 0, %s8, %s6
  loop: start=0, step=1, limit=4
  $region2: #{early_cnn_forward.5} parent=0 // loop_pre_header
    _
  $region3: #{early_cnn_forward.5} parent=0 // loop_header
    %s11 = sphi 0, %s15
    %p12 = scmp.ge.s32.totalorder %s11, 4
    %s21 = sphi 0, %s23
    %s24 = sphi 0, %s21
    %s25 = sphi 0, %s24
    %s41 = sphi 0, %s25
    %s45 = sphi 0, %s45
    %s47 = sphi 0, %s45
    %s48 = sphi 0, %s47
    %s62 = sphi 0, %s48
    %s66 = sphi 0, %s66
    %s68 = sphi 0, %s66
    %s69 = sphi 0, %s68
    %s83 = sphi 0, %s69
    %s87 = sphi 0, %s87
    %s89 = sphi 0, %s87
    %s90 = sphi 0, %s89
    %s104 = sphi 0, %s90
    %s108 = sphi 0, %s108
    %s110 = sphi 0, %s108
    %s111 = sphi 0, %s110
    %s125 = sphi 0, %s111
    %s131 = sphi 0, %s133
    %s134 = sphi 0, %s131
    %s135 = sphi 0, %s134
    %s151 = sphi 0, %s135
  $region4: #{early_cnn_forward.5} parent=0 // loop_header_branch
    %14 = sbr.rel (%p12) target = $region8
  $region5: #{early_cnn_forward.5} parent=0 // loop_body
    %s16 = ssub.s32 %s11, 1
    %s17 = ssub.s32 %s11, 2
    %s18 = sadd.s32 %s11, 1
    %s19 = ssub.s32 %s11, %s18
    %p20 = scmp.eq.s32.totalorder %s19, 0
    %s22 = sadd.s32 %s21, 1
    %s23 = scalar_select %p20, %s21, %s22
    %p26 = pneg %p20
    %p27 = scmp.eq.s32.totalorder %s11, 1
    %p28 = por %p26, %p27
    %p29 = scmp.ne.s32.totalorder %s21, %s24
    %p30 = scmp.eq.s32.totalorder %s11, 0
    %p31 = por %p29, %p30
    %p32 = scmp.ne.s32.totalorder %s21, %s24
    %p33 = scmp.eq.s32.totalorder %s16, 1
    %p34 = por %p32, %p33
    %p35 = scmp.ne.s32.totalorder %s24, %s25
    %p36 = scmp.eq.s32.totalorder %s16, 0
    %p37 = por %p35, %p36
    %p38 = scmp.ne.s32.totalorder %s24, %s25
    %p39 = scmp.eq.s32.totalorder %s17, 1
    %p40 = por %p38, %p39
    %p42 = scmp.ne.s32.totalorder %s25, %s41
    %p43 = scmp.eq.s32.totalorder %s17, 0
    %p44 = por %p42, %p43
    %s46 = sadd.s32 %s45, 1
    %p49 = scmp.eq.s32.totalorder %s11, 1
    %p50 = scmp.ne.s32.totalorder %s45, %s47
    %p51 = scmp.eq.s32.totalorder %s11, 0
    %p52 = por %p50, %p51
    %p53 = scmp.ne.s32.totalorder %s45, %s47
    %p54 = scmp.eq.s32.totalorder %s16, 1
    %p55 = por %p53, %p54
    %p56 = scmp.ne.s32.totalorder %s47, %s48
    %p57 = scmp.eq.s32.totalorder %s16, 0
    %p58 = por %p56, %p57
    %p59 = scmp.ne.s32.totalorder %s47, %s48
    %p60 = scmp.eq.s32.totalorder %s17, 1
    %p61 = por %p59, %p60
    %p63 = scmp.ne.s32.totalorder %s48, %s62
    %p64 = scmp.eq.s32.totalorder %s17, 0
    %p65 = por %p63, %p64
    %s67 = sadd.s32 %s66, 1
    %p70 = scmp.eq.s32.totalorder %s11, 1
    %p71 = scmp.ne.s32.totalorder %s66, %s68
    %p72 = scmp.eq.s32.totalorder %s11, 0
    %p73 = por %p71, %p72
    %p74 = scmp.ne.s32.totalorder %s66, %s68
    %p75 = scmp.eq.s32.totalorder %s16, 1
    %p76 = por %p74, %p75
    %p77 = scmp.ne.s32.totalorder %s68, %s69
    %p78 = scmp.eq.s32.totalorder %s16, 0
    %p79 = por %p77, %p78
    %p80 = scmp.ne.s32.totalorder %s68, %s69
    %p81 = scmp.eq.s32.totalorder %s17, 1
    %p82 = por %p80, %p81
    %p84 = scmp.ne.s32.totalorder %s69, %s83
    %p85 = scmp.eq.s32.totalorder %s17, 0
    %p86 = por %p84, %p85
    %s88 = sadd.s32 %s87, 1
    %p91 = scmp.eq.s32.totalorder %s11, 1
    %p92 = scmp.ne.s32.totalorder %s87, %s89
    %p93 = scmp.eq.s32.totalorder %s11, 0
    %p94 = por %p92, %p93
    %p95 = scmp.ne.s32.totalorder %s87, %s89
    %p96 = scmp.eq.s32.totalorder %s16, 1
    %p97 = por %p95, %p96
    %p98 = scmp.ne.s32.totalorder %s89, %s90
    %p99 = scmp.eq.s32.totalorder %s16, 0
    %p100 = por %p98, %p99
    %p101 = scmp.ne.s32.totalorder %s89, %s90
    %p102 = scmp.eq.s32.totalorder %s17, 1
    %p103 = por %p101, %p102
    %p105 = scmp.ne.s32.totalorder %s90, %s104
    %p106 = scmp.eq.s32.totalorder %s17, 0
    %p107 = por %p105, %p106
    %s109 = sadd.s32 %s108, 1
    %p112 = scmp.eq.s32.totalorder %s11, 1
    %p113 = scmp.ne.s32.totalorder %s108, %s110
    %p114 = scmp.eq.s32.totalorder %s11, 0
    %p115 = por %p113, %p114
    %p116 = scmp.ne.s32.totalorder %s108, %s110
    %p117 = scmp.eq.s32.totalorder %s16, 1
    %p118 = por %p116, %p117
    %p119 = scmp.ne.s32.totalorder %s110, %s111
    %p120 = scmp.eq.s32.totalorder %s16, 0
    %p121 = por %p119, %p120
    %p122 = scmp.ne.s32.totalorder %s110, %s111
    %p123 = scmp.eq.s32.totalorder %s17, 1
    %p124 = por %p122, %p123
    %p126 = scmp.ne.s32.totalorder %s111, %s125
    %p127 = scmp.eq.s32.totalorder %s17, 0
    %p128 = por %p126, %p127
    %s129 = ssub.s32 %s11, %s18
    %p130 = scmp.eq.s32.totalorder %s129, 0
    %s132 = sadd.s32 %s131, 1
    %s133 = scalar_select %p130, %s131, %s132
    %p136 = pneg %p130
    %p137 = scmp.eq.s32.totalorder %s11, 1
    %p138 = por %p136, %p137
    %p139 = scmp.ne.s32.totalorder %s131, %s134
    %p140 = scmp.eq.s32.totalorder %s11, 0
    %p141 = por %p139, %p140
    %p142 = scmp.ne.s32.totalorder %s131, %s134
    %p143 = scmp.eq.s32.totalorder %s16, 1
    %p144 = por %p142, %p143
    %p145 = scmp.ne.s32.totalorder %s134, %s135
    %p146 = scmp.eq.s32.totalorder %s16, 0
    %p147 = por %p145, %p146
    %p148 = scmp.ne.s32.totalorder %s134, %s135
    %p149 = scmp.eq.s32.totalorder %s17, 1
    %p150 = por %p148, %p149
    %p152 = scmp.ne.s32.totalorder %s135, %s151
    %p153 = scmp.eq.s32.totalorder %s17, 0
    %p154 = por %p152, %p153
    %p155 = scmp.le.s32.totalorder 1, %s11
    %p156 = scmp.lt.s32.totalorder %s11, 3
    %p157 = pnand %p155, %p156
    %p158 = pneg %p157
    // Predicated region
    $region9: #{early_cnn_forward.5} parent=5 // pred_check
      _
    $region10: #{early_cnn_forward.5} parent=5 // pred_check_branch
      %160 = sbr.rel (%p157) target = $region12
    $region11: #{early_cnn_forward.5} parent=5 // pred_region
      %s161 = ssub.s32 %s11, 1
      // Predicated region
      $region13: #{early_cnn_forward.5} parent=11 // pred_check
        %p162 = pneg %p58
      $region14: #{early_cnn_forward.5} parent=11 // pred_check_branch
        %164 = sbr.rel (%p162) target = $region16
      $region15: #{early_cnn_forward.5} parent=11 // pred_region
        _
      $region16: #{early_cnn_forward.5} parent=11 // pred_fallthru
        _
      // Predicated region
      $region17: #{early_cnn_forward.5} parent=11 // pred_check
        %p165 = pneg %p79
      $region18: #{early_cnn_forward.5} parent=11 // pred_check_branch
        %167 = sbr.rel (%p165) target = $region20
      $region19: #{early_cnn_forward.5} parent=11 // pred_region
        _
      $region20: #{early_cnn_forward.5} parent=11 // pred_fallthru
        _
      // Predicated region
      $region21: #{early_cnn_forward.5} parent=11 // pred_check
        %p168 = pneg %p100
      $region22: #{early_cnn_forward.5} parent=11 // pred_check_branch
        %170 = sbr.rel (%p168) target = $region24
      $region23: #{early_cnn_forward.5} parent=11 // pred_region
        _
      $region24: #{early_cnn_forward.5} parent=11 // pred_fallthru
        _
      // Predicated region
      $region25: #{early_cnn_forward.5} parent=11 // pred_check
        %p171 = pneg %p121
      $region26: #{early_cnn_forward.5} parent=11 // pred_check_branch
        %173 = sbr.rel (%p171) target = $region28
      $region27: #{early_cnn_forward.5} parent=11 // pred_region
        _
      $region28: #{early_cnn_forward.5} parent=11 // pred_fallthru
        _
    $region12: #{early_cnn_forward.5} parent=5 // pred_fallthru
      _
    %p174 = scmp.lt.s32.totalorder %s11, 2
    // Predicated region
    $region29: #{early_cnn_forward.5} parent=5 // pred_check
      %p175 = pneg %p174
    $region30: #{early_cnn_forward.5} parent=5 // pred_check_branch
      %177 = sbr.rel (%p175) target = $region32
    $region31: #{early_cnn_forward.5} parent=5 // pred_region
      // Predicated region
      $region33: #{early_cnn_forward.5} parent=31 // pred_check
        %p178 = pneg %p31
      $region34: #{early_cnn_forward.5} parent=31 // pred_check_branch
        %180 = sbr.rel (%p178) target = $region36
      $region35: #{early_cnn_forward.5} parent=31 // pred_region
        %p181 = scmp.lt.s32.totalorder %s11, 1
        %s182 = scalar_select %p181, %s11, 1
        %s183 = smul.addr %s182, 2
        %s184 = smul.addr %s183, 4
        %s185 = scalar_lea.vmem %s0, %s184
      $region36: #{early_cnn_forward.5} parent=31 // pred_fallthru
        _
    $region32: #{early_cnn_forward.5} parent=5 // pred_fallthru
      _
    %p186 = scmp.le.s32.totalorder 1, %s11
    %p187 = scmp.lt.s32.totalorder %s11, 3
    %p188 = pnand %p186, %p187
    %p189 = pneg %p188
    // Predicated region
    $region37: #{early_cnn_forward.5} parent=5 // pred_check
      _
    $region38: #{early_cnn_forward.5} parent=5 // pred_check_branch
      %191 = sbr.rel (%p188) target = $region40
    $region39: #{early_cnn_forward.5} parent=5 // pred_region
      %s192 = ssub.s32 %s11, 1
      %p193 = scmp.lt.s32.totalorder %s16, 1
      %s194 = scalar_select %p193, %s16, 1
      %s195 = smul.addr %s194, 2
      %s196 = smul.addr %s195, 4
      %s197 = scalar_lea.vmem %s0, %s196
      %p198 = pneg %p37
      %p199 = pneg %p34
      %p200 = pneg %p58
      %p201 = pneg %p55
      %p202 = pneg %p79
      %p203 = pneg %p76
      %p204 = pneg %p100
      %p205 = pneg %p97
      %p206 = pneg %p121
      %p207 = pneg %p118
      %p208 = pneg %p147
      %p209 = pneg %p144
      %p210 = scmp.lt.s32.totalorder %s16, 1
      %s211 = scalar_select %p210, %s16, 1
      %s212 = smul.addr %s211, 4
      %s213 = scalar_lea.vmem %s5, %s212
      %p214 = scmp.lt.s32.totalorder %s16, 1
      %s215 = scalar_select %p214, %s16, 1
      %s216 = smul.addr %s215, 2
      %s217 = smul.addr %s216, 4
      %s218 = scalar_lea.vmem %s0, %s217
      %p219 = scmp.lt.s32.totalorder %s16, 1
      %s220 = scalar_select %p219, %s16, 1
      %s221 = smul.addr %s220, 4
      %s222 = scalar_lea.vmem %s5, %s221
      %v224 = vld [vmem:[%s218] sm:$0x7]
      %v225 = vld [vmem:[%s1] sm:$0xf]
      %v226 = vld [vmem:[%s1 + $0x4] sm:$0xf]
      %v227 = vld [vmem:[%s1 + $0x8] sm:$0xf]
      %v228 = vld [vmem:[%s1 + $0xc] sm:$0xf]
      %v229 = vld [vmem:[%s218] sm:$0xf]
      %s230 = scalar_lea.vmem %s1, 16
      %v231 = vld [vmem:[%s230] sm:$0xf]
      %v232 = vld [vmem:[%s230 + $0x4] sm:$0xf]
      %v233 = vld [vmem:[%s230 + $0x8] sm:$0xf]
      %v234 = vld [vmem:[%s230 + $0xc] sm:$0xf]
      %v236 = vunpack.c.l.b16 %v229
      %v237 = vpack.c.b16 %v236, %v236
      %v239 = vshrl.u32 %v237, 16
      %v241 = vshll.u32 %v237, 16
      %v243 = vrot.slane %v241, 1
      %v244 = vor.u32 %v239, %v243
      %v249 = vunpack.c.l.b16 %v231
      %v250 = vunpack.c.l.b16 %v232
      %v251 = vunpack.c.l.b16 %v233
      %v252 = vunpack.c.l.b16 %v234
      %v253 = vpack.c.b16 %v250, %v249
      %v254 = vpack.c.b16 %v252, %v251
      %vm257 = vcmask 261120
      %v259 = vsel %vm257, %v244, 0
      %261 = vmatprep.subr.bf16.mxu0 0
      %262 = vmatpush1.bf16.msra.mxu0 0
      %263 = vmatprep.subr.bf16.mxu0 0
      %264 = vmatpush1.bf16.msra.mxu0 0
      %265 = vmatprep.subr.bf16.mxu0 0
      %266 = vmatpush1.bf16.msra.mxu0 0
      %267 = vmatprep.subr.bf16.mxu0 0
      %268 = vmatpush1.bf16.msra.mxu0 0
      %269 = vmatprep.subr.bf16.mxu0 0
      %270 = vmatpush1.bf16.msra.mxu0 0
      %271 = vmatprep.subr.bf16.mxu0 0
      %272 = vmatpush1.bf16.msra.mxu0 0
      %273 = vmatprep.subr.bf16.mxu0 0
      %274 = vmatpush1.bf16.msra.mxu0 %v254
      %275 = vmatprep.subr.bf16.mxu0 0
      %276 = vmatpush1.bf16.msra.mxu0 %v253
      %277 = vmatprep.subr.bf16.mxu0 0
      %278 = vmatpush2.bf16.msra.mxu0 0
      %279 = vmatprep.subr.bf16.mxu0 0
      %280 = vmatpush2.bf16.msra.mxu0 0
      %281 = vmatprep.subr.bf16.mxu0 0
      %282 = vmatpush2.bf16.msra.mxu0 0
      %283 = vmatprep.subr.bf16.mxu0 0
      %284 = vmatpush2.bf16.msra.mxu0 0
      %285 = vmatprep.subr.bf16.mxu0 0
      %286 = vmatpush2.bf16.msra.mxu0 0
      %287 = vmatprep.subr.bf16.mxu0 0
      %288 = vmatpush2.bf16.msra.mxu0 0
      %289 = vmatprep.subr.bf16.mxu0 0
      %290 = vmatpush2.bf16.msra.mxu0 0
      %291 = vmatprep.subr.bf16.mxu0 0
      %292 = vmatpush2.bf16.msra.mxu0 0
      %293 = vmatprep.mubr.bf16.mxu0 0
      %294 = vmatmul.mubr.bf16.gmra.mxu0 %v259
      %v295 = vpop.f32.mrf.mxu0
      %v296 = vadd.f32 0.0, %v295
      %v297 = vpop.f32.mrf.mxu0
      %v298 = vpop.f32.mrf.mxu0
      %v299 = vpop.f32.mrf.mxu0
      %300 = vdwg.mxu0
      %v305 = vunpack.c.l.b16 %v225
      %v306 = vunpack.c.l.b16 %v226
      %v307 = vunpack.c.l.b16 %v227
      %v308 = vunpack.c.l.b16 %v228
      %v309 = vpack.c.b16 %v306, %v305
      %v310 = vpack.c.b16 %v308, %v307
      %v314 = vsel %vm257, %v224, 0
      %316 = vmatprep.subr.bf16.mxu0 0
      %317 = vmatpush1.bf16.msra.mxu0 0
      %318 = vmatprep.subr.bf16.mxu0 0
      %319 = vmatpush1.bf16.msra.mxu0 0
      %320 = vmatprep.subr.bf16.mxu0 0
      %321 = vmatpush1.bf16.msra.mxu0 0
      %322 = vmatprep.subr.bf16.mxu0 0
      %323 = vmatpush1.bf16.msra.mxu0 0
      %324 = vmatprep.subr.bf16.mxu0 0
      %325 = vmatpush1.bf16.msra.mxu0 0
      %326 = vmatprep.subr.bf16.mxu0 0
      %327 = vmatpush1.bf16.msra.mxu0 0
      %328 = vmatprep.subr.bf16.mxu0 0
      %329 = vmatpush1.bf16.msra.mxu0 %v310
      %330 = vmatprep.subr.bf16.mxu0 0
      %331 = vmatpush1.bf16.msra.mxu0 %v309
      %332 = vmatprep.subr.bf16.mxu0 0
      %333 = vmatpush2.bf16.msra.mxu0 0
      %334 = vmatprep.subr.bf16.mxu0 0
      %335 = vmatpush2.bf16.msra.mxu0 0
      %336 = vmatprep.subr.bf16.mxu0 0
      %337 = vmatpush2.bf16.msra.mxu0 0
      %338 = vmatprep.subr.bf16.mxu0 0
      %339 = vmatpush2.bf16.msra.mxu0 0
      %340 = vmatprep.subr.bf16.mxu0 0
      %341 = vmatpush2.bf16.msra.mxu0 0
      %342 = vmatprep.subr.bf16.mxu0 0
      %343 = vmatpush2.bf16.msra.mxu0 0
      %344 = vmatprep.subr.bf16.mxu0 0
      %345 = vmatpush2.bf16.msra.mxu0 0
      %346 = vmatprep.subr.bf16.mxu0 0
      %347 = vmatpush2.bf16.msra.mxu0 0
      %348 = vmatprep.mubr.bf16.mxu0 0
      %349 = vmatmul.mubr.bf16.gmra.mxu0 %v314
      %v350 = vpop.f32.mrf.mxu0
      %v351 = vadd.f32 %v296, %v350
      %v352 = vpop.f32.mrf.mxu0
      %v353 = vpop.f32.mrf.mxu0
      %v354 = vpop.f32.mrf.mxu0
      %355 = vdwg.mxu0
      %v356 = vld [vmem:[%s218] sm:$0xe]
      %v357 = vld [vmem:[%s218 + $0x4] sm:$0x1]
      %s358 = scalar_lea.vmem %s1, 32
      %v359 = vld [vmem:[%s358] sm:$0xf]
      %v360 = vld [vmem:[%s358 + $0x4] sm:$0xf]
      %v361 = vld [vmem:[%s358 + $0x8] sm:$0xf]
      %v362 = vld [vmem:[%s358 + $0xc] sm:$0xf]
      %v365 = vunpack.c.l.b16 %v356
      %v366 = vunpack.c.l.b16 %v357
      %v367 = vpack.c.b16 %v366, %v365
      %v369 = vshrl.u32 %v367, 16
      %v371 = vrot.slane %v369, 1
      %v372 = vshll.u32 %v367, 16
      %v374 = vrot.slane %v372, 2
      %v375 = vor.u32 %v371, %v374
      %v380 = vunpack.c.l.b16 %v359
      %v381 = vunpack.c.l.b16 %v360
      %v382 = vunpack.c.l.b16 %v361
      %v383 = vunpack.c.l.b16 %v362
      %v384 = vpack.c.b16 %v381, %v380
      %v385 = vpack.c.b16 %v383, %v382
      %v389 = vsel %vm257, %v375, 0
      %391 = vmatprep.subr.bf16.mxu0 0
      %392 = vmatpush1.bf16.msra.mxu0 0
      %393 = vmatprep.subr.bf16.mxu0 0
      %394 = vmatpush1.bf16.msra.mxu0 0
      %395 = vmatprep.subr.bf16.mxu0 0
      %396 = vmatpush1.bf16.msra.mxu0 0
      %397 = vmatprep.subr.bf16.mxu0 0
      %398 = vmatpush1.bf16.msra.mxu0 0
      %399 = vmatprep.subr.bf16.mxu0 0
      %400 = vmatpush1.bf16.msra.mxu0 0
      %401 = vmatprep.subr.bf16.mxu0 0
      %402 = vmatpush1.bf16.msra.mxu0 0
      %403 = vmatprep.subr.bf16.mxu0 0
      %404 = vmatpush1.bf16.msra.mxu0 %v385
      %405 = vmatprep.subr.bf16.mxu0 0
      %406 = vmatpush1.bf16.msra.mxu0 %v384
      %407 = vmatprep.subr.bf16.mxu0 0
      %408 = vmatpush2.bf16.msra.mxu0 0
      %409 = vmatprep.subr.bf16.mxu0 0
      %410 = vmatpush2.bf16.msra.mxu0 0
      %411 = vmatprep.subr.bf16.mxu0 0
      %412 = vmatpush2.bf16.msra.mxu0 0
      %413 = vmatprep.subr.bf16.mxu0 0
      %414 = vmatpush2.bf16.msra.mxu0 0
      %415 = vmatprep.subr.bf16.mxu0 0
      %416 = vmatpush2.bf16.msra.mxu0 0
      %417 = vmatprep.subr.bf16.mxu0 0
      %418 = vmatpush2.bf16.msra.mxu0 0
      %419 = vmatprep.subr.bf16.mxu0 0
      %420 = vmatpush2.bf16.msra.mxu0 0
      %421 = vmatprep.subr.bf16.mxu0 0
      %422 = vmatpush2.bf16.msra.mxu0 0
      %423 = vmatprep.mubr.bf16.mxu0 0
      %424 = vmatmul.mubr.bf16.gmra.mxu0 %v389
      %v425 = vpop.f32.mrf.mxu0
      %v426 = vadd.f32 0.0, %v425
      %v427 = vpop.f32.mrf.mxu0
      %v428 = vpop.f32.mrf.mxu0
      %v429 = vpop.f32.mrf.mxu0
      %430 = vdwg.mxu0
      %v431 = vadd.f32 %v351, %v426
      %v432 = vld [vmem:[%s218] sm:$0xc]
      %s433 = scalar_lea.vmem %s1, 48
      %v434 = vld [vmem:[%s433] sm:$0xf]
      %v435 = vld [vmem:[%s433 + $0x4] sm:$0xf]
      %v436 = vld [vmem:[%s433 + $0x8] sm:$0xf]
      %v437 = vld [vmem:[%s433 + $0xc] sm:$0xf]
      %v439 = vunpack.c.l.b16 %v432
      %v440 = vpack.c.b16 %v366, %v439
      %v441 = vrot.slane %v440, 2
      %v446 = vunpack.c.l.b16 %v434
      %v447 = vunpack.c.l.b16 %v435
      %v448 = vunpack.c.l.b16 %v436
      %v449 = vunpack.c.l.b16 %v437
      %v450 = vpack.c.b16 %v447, %v446
      %v451 = vpack.c.b16 %v449, %v448
      %v455 = vsel %vm257, %v441, 0
      %457 = vmatprep.subr.bf16.mxu0 0
      %458 = vmatpush1.bf16.msra.mxu0 0
      %459 = vmatprep.subr.bf16.mxu0 0
      %460 = vmatpush1.bf16.msra.mxu0 0
      %461 = vmatprep.subr.bf16.mxu0 0
      %462 = vmatpush1.bf16.msra.mxu0 0
      %463 = vmatprep.subr.bf16.mxu0 0
      %464 = vmatpush1.bf16.msra.mxu0 0
      %465 = vmatprep.subr.bf16.mxu0 0
      %466 = vmatpush1.bf16.msra.mxu0 0
      %467 = vmatprep.subr.bf16.mxu0 0
      %468 = vmatpush1.bf16.msra.mxu0 0
      %469 = vmatprep.subr.bf16.mxu0 0
      %470 = vmatpush1.bf16.msra.mxu0 %v451
      %471 = vmatprep.subr.bf16.mxu0 0
      %472 = vmatpush1.bf16.msra.mxu0 %v450
      %473 = vmatprep.subr.bf16.mxu0 0
      %474 = vmatpush2.bf16.msra.mxu0 0
      %475 = vmatprep.subr.bf16.mxu0 0
      %476 = vmatpush2.bf16.msra.mxu0 0
      %477 = vmatprep.subr.bf16.mxu0 0
      %478 = vmatpush2.bf16.msra.mxu0 0
      %479 = vmatprep.subr.bf16.mxu0 0
      %480 = vmatpush2.bf16.msra.mxu0 0
      %481 = vmatprep.subr.bf16.mxu0 0
      %482 = vmatpush2.bf16.msra.mxu0 0
      %483 = vmatprep.subr.bf16.mxu0 0
      %484 = vmatpush2.bf16.msra.mxu0 0
      %485 = vmatprep.subr.bf16.mxu0 0
      %486 = vmatpush2.bf16.msra.mxu0 0
      %487 = vmatprep.subr.bf16.mxu0 0
      %488 = vmatpush2.bf16.msra.mxu0 0
      %489 = vmatprep.mubr.bf16.mxu0 0
      %490 = vmatmul.mubr.bf16.gmra.mxu0 %v455
      %v491 = vpop.f32.mrf.mxu0
      %v492 = vadd.f32 0.0, %v491
      %v493 = vpop.f32.mrf.mxu0
      %v494 = vpop.f32.mrf.mxu0
      %v495 = vpop.f32.mrf.mxu0
      %496 = vdwg.mxu0
      %v497 = vadd.f32 %v431, %v492
      %v498 = vld [vmem:[%s2] sm:$0x1]
      %v500 = vlaneseq
      %v501 = vshrl.u32 %v500, 7
      %v502 = vsub.s32 0, %v501
      %v503 = vrot.slane %v498, %v502
      %v505 = vadd.f32 %v497, %v503
      %v506 = vmax.f32 %v505, 0.0
      %v507 = vpack.c.bf16 %v506, %v506
      %v508 = vld [vmem:[%s3] sm:$0xf]
      %v509 = vld [vmem:[%s3 + $0x4] sm:$0xf]
      %v510 = vld [vmem:[%s4] sm:$0x1]
      %v512 = vlaneseq
      %v513 = vshrl.u32 %v512, 7
      %v514 = vsub.s32 0, %v513
      %v515 = vrot.slane %v510, %v514
      %v519 = vunpack.c.l.b16 %v508
      %v520 = vunpack.c.l.b16 %v509
      %v521 = vpack.c.b16 %v520, %v519
      %vm523 = vcmask 130048
      %v525 = vsel %vm523, %v507, 0
      %527 = vmatprep.subr.bf16.mxu0 0
      %528 = vmatpush1.bf16.msra.mxu0 0
      %529 = vmatprep.subr.bf16.mxu0 0
      %530 = vmatpush1.bf16.msra.mxu0 0
      %531 = vmatprep.subr.bf16.mxu0 0
      %532 = vmatpush1.bf16.msra.mxu0 0
      %533 = vmatprep.subr.bf16.mxu0 0
      %534 = vmatpush1.bf16.msra.mxu0 0
      %535 = vmatprep.subr.bf16.mxu0 0
      %536 = vmatpush1.bf16.msra.mxu0 0
      %537 = vmatprep.subr.bf16.mxu0 0
      %538 = vmatpush1.bf16.msra.mxu0 0
      %539 = vmatprep.subr.bf16.mxu0 0
      %540 = vmatpush1.bf16.msra.mxu0 0
      %541 = vmatprep.subr.bf16.mxu0 0
      %542 = vmatpush1.bf16.msra.mxu0 %v521
      %543 = vmatprep.subr.bf16.mxu0 0
      %544 = vmatpush2.bf16.msra.mxu0 0
      %545 = vmatprep.subr.bf16.mxu0 0
      %546 = vmatpush2.bf16.msra.mxu0 0
      %547 = vmatprep.subr.bf16.mxu0 0
      %548 = vmatpush2.bf16.msra.mxu0 0
      %549 = vmatprep.subr.bf16.mxu0 0
      %550 = vmatpush2.bf16.msra.mxu0 0
      %551 = vmatprep.subr.bf16.mxu0 0
      %552 = vmatpush2.bf16.msra.mxu0 0
      %553 = vmatprep.subr.bf16.mxu0 0
      %554 = vmatpush2.bf16.msra.mxu0 0
      %555 = vmatprep.subr.bf16.mxu0 0
      %556 = vmatpush2.bf16.msra.mxu0 0
      %557 = vmatprep.subr.bf16.mxu0 0
      %558 = vmatpush2.bf16.msra.mxu0 0
      %559 = vmatprep.mubr.bf16.mxu0 0
      %560 = vmatmul.mubr.bf16.gmra.mxu0 %v525
      %v561 = vpop.f32.mrf.mxu0
      %v562 = vadd.f32 %v515, %v561
      %v563 = vpop.f32.mrf.mxu0
      %v564 = vpop.f32.mrf.mxu0
      %v565 = vpop.f32.mrf.mxu0
      %566 = vdwg.mxu0
      %v567 = vpack.c.bf16 %v562, %v562
      %vm568 = vcmask 256000
      %569 = vst.msk [vmem:[%s222] sm:$0x7] %vm568, %v567
      %p570 = scmp.lt.s32.totalorder %s16, 1
      %s571 = scalar_select %p570, %s16, 1
      %s572 = smul.addr %s571, 4
      %s573 = scalar_lea.vmem %s5, %s572
      // Predicated region
      $region41: #{early_cnn_forward.5} parent=39 // pred_check
        %p574 = pneg %p144
      $region42: #{early_cnn_forward.5} parent=39 // pred_check_branch
        %576 = sbr.rel (%p574) target = $region44
      $region43: #{early_cnn_forward.5} parent=39 // pred_region
        _
      $region44: #{early_cnn_forward.5} parent=39 // pred_fallthru
        _
    $region40: #{early_cnn_forward.5} parent=5 // pred_fallthru
      _
    %p577 = scmp.le.s32.totalorder 2, %s11
    // Predicated region
    $region45: #{early_cnn_forward.5} parent=5 // pred_check
      %p578 = pneg %p577
    $region46: #{early_cnn_forward.5} parent=5 // pred_check_branch
      %580 = sbr.rel (%p578) target = $region48
    $region47: #{early_cnn_forward.5} parent=5 // pred_region
      %s581 = ssub.s32 %s11, 2
      // Predicated region
      $region49: #{early_cnn_forward.5} parent=47 // pred_check
        %p582 = pneg %p150
      $region50: #{early_cnn_forward.5} parent=47 // pred_check_branch
        %584 = sbr.rel (%p582) target = $region52
      $region51: #{early_cnn_forward.5} parent=47 // pred_region
        %p585 = scmp.lt.s32.totalorder %s17, 1
        %s586 = scalar_select %p585, %s17, 1
        %s587 = smul.addr %s586, 4
        %s588 = scalar_lea.vmem %s5, %s587
      $region52: #{early_cnn_forward.5} parent=47 // pred_fallthru
        _
    $region48: #{early_cnn_forward.5} parent=5 // pred_fallthru
      _
  $region6: #{early_cnn_forward.5} parent=0 // loop_footer
    %s15 = sadd.s32 1, %s11
  $region7: #{early_cnn_forward.5} parent=0 // loop_footer_branch
    %10 = sbr.rel target = $region3
  $region8: #{early_cnn_forward.5} parent=0 // loop_exit
    _

</llo_original>
